<compile_context>
chip_gen: v7x
topology: tpu7x:2x2x1
jax: 0.10.0
libtpu: 0.0.40
codegen_flags: <defaults>
</compile_context>

<pallas_src>
import functools

import jax
import jax.numpy as jnp
from jax.experimental import pallas as pl
from jax.experimental.pallas import tpu as pltpu


def _round_up(x, m):
    return ((x + m - 1) // m) * m


def _pick_tile_b(B, d_in, hidden_p, d_out_p):
    """Largest multiple-of-128 batch tile that fits a conservative VMEM budget."""
    # Resident (single-buffered) bf16 weights + f32 biases.
    resident = (d_in * hidden_p + hidden_p * d_out_p) * 2 + (hidden_p + d_out_p) * 4
    # Per-row VMEM: double-buffered f32 x tile + double-buffered bf16 out tile
    # + f32 h intermediate.
    per_row = 2 * d_in * 4 + 2 * d_out_p * 2 + hidden_p * 4
    budget = 40 * 2**20  # conservative; leaves headroom on v7x's 64 MiB VMEM
    max_rows = max(128, (budget - resident) // max(per_row, 1))
    tile = min(1024, max_rows)
    # Keep at least 2 grid steps when the batch is large enough (v7x dual-TC).
    if B > 128:
        tile = min(tile, _round_up(pl.cdiv(B, 2), 128))
    # Don't allocate a tile far larger than the batch itself.
    tile = min(tile, max(128, _round_up(B, 128)))
    return max(128, (tile // 128) * 128)


def _mlp_kernel(x_ref, w1_ref, b1_ref, w2_ref, b2_ref, o_ref):
    # x_ref : (TILE_B, D_in)      f32  (cast to bf16 here, not in the wrapper)
    # w1_ref: (D_in, H_p)         bf16 (pre-transposed, resident)
    # b1_ref: (1, H_p)            f32
    # w2_ref: (H_p, D_out_p)      bf16 (pre-transposed, resident)
    # b2_ref: (1, D_out_p)        f32
    # o_ref : (TILE_B, D_out_p)   bf16 (lane-dense padded output)
    x = x_ref[...].astype(jnp.bfloat16)

    # linear1 on the MXU, f32 accumulation.
    h = jnp.dot(x, w1_ref[...], preferred_element_type=jnp.float32)
    # bias + ReLU in f32 on the VPU (v5e has no bf16 VPU path).
    h = jnp.maximum(h + b1_ref[...], 0.0)

    # linear2 (activations cast once to bf16 for the MXU, accumulate in f32).
    o = jnp.dot(h.astype(jnp.bfloat16), w2_ref[...],
                preferred_element_type=jnp.float32)
    o_ref[...] = (o + b2_ref[...]).astype(o_ref.dtype)


@functools.partial(jax.jit, static_argnames=("tile_b",))
def my_ann_forward(x, w1, b1, w2, b2, *, tile_b=None):
    """Pallas equivalent of My_Ann.forward.

    x  : (B, C, H, W) float32            (NCHW, like PyTorch)
    w1 : (hidden, d_in)   b1: (hidden,)  -- PyTorch nn.Linear layout
    w2 : (d_out, hidden)  b2: (d_out,)
    returns (B, d_out) float32
    """
    B = x.shape[0]
    x2d = x.reshape(B, -1)                 # nn.Flatten (row-major NCHW flatten)
    d_in = x2d.shape[1]
    hidden = w1.shape[0]
    d_out = w2.shape[0]

    # Lane-dense padding of the hidden and output feature axes.
    hidden_p = _round_up(hidden, 128)
    d_out_p = _round_up(d_out, 128)

    if tile_b is None:
        tile_b = _pick_tile_b(B, d_in, hidden_p, d_out_p)
    assert tile_b % 128 == 0, "tile_b must be a multiple of 128"

    # One-time weight prep (tiny vs the per-call x traffic): zero-pad, transpose
    # to contraction-on-axis-0 layout, cast to bf16 for the MXU.
    w1_t = jnp.pad(w1, ((0, hidden_p - hidden), (0, 0))).T.astype(jnp.bfloat16)          # (d_in, hidden_p)
    w2_t = jnp.pad(w2, ((0, d_out_p - d_out), (0, hidden_p - hidden))).T.astype(jnp.bfloat16)  # (hidden_p, d_out_p)
    b1_2d = jnp.pad(b1, (0, hidden_p - hidden)).reshape(1, hidden_p).astype(jnp.float32)
    b2_2d = jnp.pad(b2, (0, d_out_p - d_out)).reshape(1, d_out_p).astype(jnp.float32)

    grid = (pl.cdiv(B, tile_b),)           # Pallas masks the ragged last block

    # VMEM accounting: double-buffered x/out tiles, single-buffered weights,
    # f32 h intermediate.
    bytes_needed = (
        2 * tile_b * d_in * 4
        + 2 * tile_b * d_out_p * 2
        + (d_in * hidden_p + hidden_p * d_out_p) * 2
        + (hidden_p + d_out_p) * 4
        + tile_b * hidden_p * 4
    )
    try:
        phys_vmem = int(pltpu.get_tpu_info().vmem_capacity_bytes)
    except Exception:
        phys_vmem = 64 * 2**20             # conservative (v7x per-TC VMEM)
    vmem_limit = int(min(int(0.85 * phys_vmem), max(32 * 2**20, 2 * bytes_needed)))

    cost = pl.CostEstimate(
        flops=2 * B * (d_in * hidden_p + hidden_p * d_out_p),
        transcendentals=0,
        bytes_accessed=(x2d.size * 4 + w1_t.size * 2 + w2_t.size * 2
                        + b1_2d.size * 4 + b2_2d.size * 4 + B * d_out_p * 2),
    )

    # TODO(synk): for very large d_in (w1 slab approaching the VMEM limit, esp.
    # v7x 64 MiB), add a trailing "arbitrary" grid axis over d_in with an f32
    # VMEM h-accumulator, running bias/ReLU/linear2 only on the last k step.
    out_p = pl.pallas_call(
        _mlp_kernel,
        out_shape=jax.ShapeDtypeStruct((B, d_out_p), jnp.bfloat16),
        grid_spec=pltpu.PrefetchScalarGridSpec(
            num_scalar_prefetch=0,
            grid=grid,
            in_specs=[
                # x: tiled over batch, double-buffered (default).
                pl.BlockSpec((tile_b, d_in), lambda i: (i, 0)),
                # Resident operands: constant index_map -> single-buffered.
                pl.BlockSpec((d_in, hidden_p), lambda i: (0, 0),
                             pipeline_mode=pl.Buffered(1)),
                pl.BlockSpec((1, hidden_p), lambda i: (0, 0),
                             pipeline_mode=pl.Buffered(1)),
                pl.BlockSpec((hidden_p, d_out_p), lambda i: (0, 0),
                             pipeline_mode=pl.Buffered(1)),
                pl.BlockSpec((1, d_out_p), lambda i: (0, 0),
                             pipeline_mode=pl.Buffered(1)),
            ],
            out_specs=pl.BlockSpec((tile_b, d_out_p), lambda i: (i, 0)),
        ),
        compiler_params=pltpu.CompilerParams(
            dimension_semantics=("parallel",),
            vmem_limit_bytes=vmem_limit,
        ),
        cost_estimate=cost,
    )(x2d, w1_t, b1_2d, w2_t, b2_2d)

    return out_p[:, :d_out].astype(jnp.float32)


def _reference(x, w1, b1, w2, b2):
    x2d = x.reshape(x.shape[0], -1)
    h = jnp.maximum(x2d @ w1.T + b1, 0.0)
    return h @ w2.T + b2


if __name__ == "__main__":
    # Small shapes consistent with the module: flatten a (2,4,16,16) NCHW image
    # -> num_inputs=1024, hidden=32, num_outputs=10.
    B, C, Himg, Wimg = 2, 4, 16, 16
    num_inputs = C * Himg * Wimg
    num_hidden = 32
    num_outputs = 10

    key = jax.random.PRNGKey(0)
    kx, k1, k2, k3, k4 = jax.random.split(key, 5)

    x = jax.random.normal(kx, (B, C, Himg, Wimg), dtype=jnp.float32)
    # Deterministic parameter init (nn.Linear shapes: weight (out,in), bias (out,))
    w1 = jax.random.normal(k1, (num_hidden, num_inputs), dtype=jnp.float32) * 0.05
    b1 = jax.random.normal(k2, (num_hidden,), dtype=jnp.float32) * 0.05
    w2 = jax.random.normal(k3, (num_outputs, num_hidden), dtype=jnp.float32) * 0.05
    b2 = jax.random.normal(k4, (num_outputs,), dtype=jnp.float32) * 0.05

    out = my_ann_forward(x, w1, b1, w2, b2)
    out = jax.block_until_ready(out)

    ref = _reference(x, w1, b1, w2, b2)
    assert out.shape == (B, num_outputs)
    # bf16 matmul inputs / bf16 output tile -> loosened tolerance vs f32 reference.
    assert jnp.allclose(out, ref, atol=3e-2, rtol=3e-2)

    print("KERNEL_OK")
</pallas_src>

<mosaic_0001>
module attributes {stable_mosaic.version = 11 : i64} {
  func.func @_mlp_kernel(%arg0: i32, %arg1: memref<128x1024xf32, #tpu.memory_space<vmem>>, %arg2: memref<1024x128xbf16, #tpu.memory_space<vmem>>, %arg3: memref<1x128xf32, #tpu.memory_space<vmem>>, %arg4: memref<128x128xbf16, #tpu.memory_space<vmem>>, %arg5: memref<1x128xf32, #tpu.memory_space<vmem>>, %arg6: memref<128x128xbf16, #tpu.memory_space<vmem>>) attributes {dimension_semantics = [#tpu.dimension_semantics<parallel>], iteration_bounds = array<i64: 1>, scalar_prefetch = 0 : i64, scratch_operands = 0 : i64, tpu.core_type = #tpu.core_type<tc>, window_params = [{transform_indices = @transform_0, window_bounds = array<i64: 128, 1024>}, {pipeline_mode = #tpu.pipeline_mode<synchronous>, transform_indices = @transform_1, window_bounds = array<i64: 1024, 128>}, {pipeline_mode = #tpu.pipeline_mode<synchronous>, transform_indices = @transform_2, window_bounds = array<i64: 1, 128>}, {pipeline_mode = #tpu.pipeline_mode<synchronous>, transform_indices = @transform_3, window_bounds = array<i64: 128, 128>}, {pipeline_mode = #tpu.pipeline_mode<synchronous>, transform_indices = @transform_4, window_bounds = array<i64: 1, 128>}, {transform_indices = @transform_5, window_bounds = array<i64: 128, 128>}]} {
    %c0 = arith.constant 0 : index
    %c0_0 = arith.constant 0 : index
    %0 = vector.load %arg1[%c0, %c0_0] : memref<128x1024xf32, #tpu.memory_space<vmem>>, vector<128x1024xf32>
    %1 = arith.truncf %0 : vector<128x1024xf32> to vector<128x1024xbf16>
    %c0_1 = arith.constant 0 : index
    %c0_2 = arith.constant 0 : index
    %2 = vector.load %arg2[%c0_1, %c0_2] : memref<1024x128xbf16, #tpu.memory_space<vmem>>, vector<1024x128xbf16>
    %cst = arith.constant dense<0.000000e+00> : vector<128x128xf32>
    %3 = tpu.matmul %1, %2, %cst {dimension_numbers = #tpu.dot_dimension_numbers<[1], [0], [0], [1], [0, 0, 1, 1], [], []>} : vector<128x1024xbf16>, vector<1024x128xbf16>, vector<128x128xf32> -> vector<128x128xf32>
    %c0_3 = arith.constant 0 : index
    %c0_4 = arith.constant 0 : index
    %4 = vector.load %arg3[%c0_3, %c0_4] : memref<1x128xf32, #tpu.memory_space<vmem>>, vector<1x128xf32>
    %5 = vector.broadcast %4 : vector<1x128xf32> to vector<128x128xf32>
    %6 = arith.addf %3, %5 : vector<128x128xf32>
    %cst_5 = arith.constant 0.000000e+00 : f32
    %7 = vector.broadcast %cst_5 : f32 to vector<128x128xf32>
    %8 = arith.maximumf %6, %7 : vector<128x128xf32>
    %9 = arith.truncf %8 : vector<128x128xf32> to vector<128x128xbf16>
    %c0_6 = arith.constant 0 : index
    %c0_7 = arith.constant 0 : index
    %10 = vector.load %arg4[%c0_6, %c0_7] : memref<128x128xbf16, #tpu.memory_space<vmem>>, vector<128x128xbf16>
    %cst_8 = arith.constant dense<0.000000e+00> : vector<128x128xf32>
    %11 = tpu.matmul %9, %10, %cst_8 {dimension_numbers = #tpu.dot_dimension_numbers<[1], [0], [0], [1], [0, 0, 1, 1], [], []>} : vector<128x128xbf16>, vector<128x128xbf16>, vector<128x128xf32> -> vector<128x128xf32>
    %c0_9 = arith.constant 0 : index
    %c0_10 = arith.constant 0 : index
    %12 = vector.load %arg5[%c0_9, %c0_10] : memref<1x128xf32, #tpu.memory_space<vmem>>, vector<1x128xf32>
    %13 = vector.broadcast %12 : vector<1x128xf32> to vector<128x128xf32>
    %14 = arith.addf %11, %13 : vector<128x128xf32>
    %15 = arith.truncf %14 : vector<128x128xf32> to vector<128x128xbf16>
    %c0_11 = arith.constant 0 : index
    %c0_12 = arith.constant 0 : index
    %16 = vector.load %arg6[%c0_11, %c0_12] : memref<128x128xbf16, #tpu.memory_space<vmem>>, vector<128x128xbf16>
    tpu.vector_store %arg6[%c0_11, %c0_12], %15 {strides = array<i32>} : memref<128x128xbf16, #tpu.memory_space<vmem>>, vector<128x128xbf16>,
    return
  }
  func.func @transform_0(%arg0: i32) -> (i32, i32) {
    %c0_i32 = arith.constant 0 : i32
    %c0_i32_0 = arith.constant 0 : i32
    return %arg0, %c0_i32 : i32, i32
  }
  func.func @transform_1(%arg0: i32) -> (i32, i32) {
    %c0_i32 = arith.constant 0 : i32
    %c0_i32_0 = arith.constant 0 : i32
    %c0_i32_1 = arith.constant 0 : i32
    return %c0_i32, %c0_i32_0 : i32, i32
  }
  func.func @transform_2(%arg0: i32) -> (i32, i32) {
    %c0_i32 = arith.constant 0 : i32
    %c0_i32_0 = arith.constant 0 : i32
    %c0_i32_1 = arith.constant 0 : i32
    return %c0_i32, %c0_i32_0 : i32, i32
  }
  func.func @transform_3(%arg0: i32) -> (i32, i32) {
    %c0_i32 = arith.constant 0 : i32
    %c0_i32_0 = arith.constant 0 : i32
    %c0_i32_1 = arith.constant 0 : i32
    return %c0_i32, %c0_i32_0 : i32, i32
  }
  func.func @transform_4(%arg0: i32) -> (i32, i32) {
    %c0_i32 = arith.constant 0 : i32
    %c0_i32_0 = arith.constant 0 : i32
    %c0_i32_1 = arith.constant 0 : i32
    return %c0_i32, %c0_i32_0 : i32, i32
  }
  func.func @transform_5(%arg0: i32) -> (i32, i32) {
    %c0_i32 = arith.constant 0 : i32
    %c0_i32_0 = arith.constant 0 : i32
    return %arg0, %c0_i32 : i32, i32
  }
}

</mosaic_0001>

<llo_original>
// kernel: my_ann_forward.1
$region0: #{my_ann_forward.1}
  #allocation0 [shape = 'u32[]', space=smem, size = 0x4, offset = 0x4, fixed_abs, tag = 'smem constant byte address 0x4 - core index']
  #allocation1 [shape = 'u32[144,128]{1,0:T(1,128)}', space=vmem, size = 0x12000, scoped, tag = 'internal scratch']
  %s0 = inlined_call_operand.vmem [shape: f32[2,1024], index: 0, kind: input, shape index: {}]
  %s1 = inlined_call_operand.vmem [shape: bf16[1024,128], index: 1, kind: input, shape index: {}]
  %s2 = inlined_call_operand.vmem [shape: f32[1,128], index: 2, kind: input, shape index: {}]
  %s3 = inlined_call_operand.vmem [shape: bf16[128,128], index: 3, kind: input, shape index: {}]
  %s4 = inlined_call_operand.vmem [shape: f32[1,128], index: 4, kind: input, shape index: {}]
  %s5 = inlined_call_operand.vmem [shape: bf16[2,128], index: 5, kind: output, shape index: {}]
  %s6 = sld [smem:[#allocation0]]
  $region60: #{my_ann_forward.1} parent=0
    _
  %s8 = ssub.s32 1, %s6
  %s9 = scalar_select 0, %s8, %s6
  $region1: #{my_ann_forward.1} parent=0
    #allocation2 [shape = 'u8[32768]{0}', space=vmem, size = 0x8000, scoped, tag = 'output window, operand 0, single buffered']
    // Predicated region
    $region2: #{my_ann_forward.1} parent=1 // pred_check
      _
    $region3: #{my_ann_forward.1} parent=1 // pred_check_branch
      %11 = sbr.rel (0) target = $region5
    $region4: #{my_ann_forward.1} parent=1 // pred_region
      _
    $region5: #{my_ann_forward.1} parent=1 // pred_fallthru
      _
    // Predicated region
    $region6: #{my_ann_forward.1} parent=1 // pred_check
      _
    $region7: #{my_ann_forward.1} parent=1 // pred_check_branch
      %13 = sbr.rel (0) target = $region9
    $region8: #{my_ann_forward.1} parent=1 // pred_region
      _
    $region9: #{my_ann_forward.1} parent=1 // pred_fallthru
      _
    // Predicated region
    $region10: #{my_ann_forward.1} parent=1 // pred_check
      _
    $region11: #{my_ann_forward.1} parent=1 // pred_check_branch
      %15 = sbr.rel (0) target = $region13
    $region12: #{my_ann_forward.1} parent=1 // pred_region
      _
    $region13: #{my_ann_forward.1} parent=1 // pred_fallthru
      _
    // Predicated region
    $region14: #{my_ann_forward.1} parent=1 // pred_check
      _
    $region15: #{my_ann_forward.1} parent=1 // pred_check_branch
      %17 = sbr.rel (0) target = $region17
    $region16: #{my_ann_forward.1} parent=1 // pred_region
      _
    $region17: #{my_ann_forward.1} parent=1 // pred_fallthru
      _
    // Predicated region
    $region18: #{my_ann_forward.1} parent=1 // pred_check
      _
    $region19: #{my_ann_forward.1} parent=1 // pred_check_branch
      %19 = sbr.rel (0) target = $region21
    $region20: #{my_ann_forward.1} parent=1 // pred_region
      _
    $region21: #{my_ann_forward.1} parent=1 // pred_fallthru
      _
    %v21 = vld [vmem:[%s0] sm:$0xff]
    %v22 = vld [vmem:[%s0 + $0x8] sm:$0xff]
    %v23 = vld [vmem:[%s0 + $0x10] sm:$0xff]
    %v24 = vld [vmem:[%s0 + $0x18] sm:$0xff]
    %v25 = vld [vmem:[%s0 + $0x20] sm:$0xff]
    %v26 = vld [vmem:[%s0 + $0x28] sm:$0xff]
    %v27 = vld [vmem:[%s0 + $0x30] sm:$0xff]
    %v28 = vld [vmem:[%s0 + $0x38] sm:$0xff]
    %v29 = vld [vmem:[%s0 + $0x40] sm:$0xff]
    %v30 = vld [vmem:[%s0 + $0x48] sm:$0xff]
    %v31 = vld [vmem:[%s0 + $0x50] sm:$0xff]
    %v32 = vld [vmem:[%s0 + $0x58] sm:$0xff]
    %v33 = vld [vmem:[%s0 + $0x60] sm:$0xff]
    %v34 = vld [vmem:[%s0 + $0x68] sm:$0xff]
    %v35 = vld [vmem:[%s0 + $0x70] sm:$0xff]
    %v36 = vld [vmem:[%s0 + $0x78] sm:$0xff]
    %v37 = vld [vmem:[%s0 + $0x80] sm:$0xff]
    %v38 = vld [vmem:[%s0 + $0x88] sm:$0xff]
    %v39 = vld [vmem:[%s0 + $0x90] sm:$0xff]
    %v40 = vld [vmem:[%s0 + $0x98] sm:$0xff]
    %v41 = vld [vmem:[%s0 + $0xa0] sm:$0xff]
    %v42 = vld [vmem:[%s0 + $0xa8] sm:$0xff]
    %v43 = vld [vmem:[%s0 + $0xb0] sm:$0xff]
    %v44 = vld [vmem:[%s0 + $0xb8] sm:$0xff]
    %v45 = vld [vmem:[%s0 + $0xc0] sm:$0xff]
    %v46 = vld [vmem:[%s0 + $0xc8] sm:$0xff]
    %v47 = vld [vmem:[%s0 + $0xd0] sm:$0xff]
    %v48 = vld [vmem:[%s0 + $0xd8] sm:$0xff]
    %v49 = vld [vmem:[%s0 + $0xe0] sm:$0xff]
    %v50 = vld [vmem:[%s0 + $0xe8] sm:$0xff]
    %v51 = vld [vmem:[%s0 + $0xf0] sm:$0xff]
    %v52 = vld [vmem:[%s0 + $0xf8] sm:$0xff]
    %v53 = vld [vmem:[%s0 + $0x100] sm:$0xff]
    %v54 = vld [vmem:[%s0 + $0x108] sm:$0xff]
    %v55 = vld [vmem:[%s0 + $0x110] sm:$0xff]
    %v56 = vld [vmem:[%s0 + $0x118] sm:$0xff]
    %v57 = vld [vmem:[%s0 + $0x120] sm:$0xff]
    %v58 = vld [vmem:[%s0 + $0x128] sm:$0xff]
    %v59 = vld [vmem:[%s0 + $0x130] sm:$0xff]
    %v60 = vld [vmem:[%s0 + $0x138] sm:$0xff]
    %v61 = vld [vmem:[%s0 + $0x140] sm:$0xff]
    %v62 = vld [vmem:[%s0 + $0x148] sm:$0xff]
    %v63 = vld [vmem:[%s0 + $0x150] sm:$0xff]
    %v64 = vld [vmem:[%s0 + $0x158] sm:$0xff]
    %v65 = vld [vmem:[%s0 + $0x160] sm:$0xff]
    %v66 = vld [vmem:[%s0 + $0x168] sm:$0xff]
    %v67 = vld [vmem:[%s0 + $0x170] sm:$0xff]
    %v68 = vld [vmem:[%s0 + $0x178] sm:$0xff]
    %v69 = vld [vmem:[%s0 + $0x180] sm:$0xff]
    %v70 = vld [vmem:[%s0 + $0x188] sm:$0xff]
    %v71 = vld [vmem:[%s0 + $0x190] sm:$0xff]
    %v72 = vld [vmem:[%s0 + $0x198] sm:$0xff]
    %v73 = vld [vmem:[%s0 + $0x1a0] sm:$0xff]
    %v74 = vld [vmem:[%s0 + $0x1a8] sm:$0xff]
    %v75 = vld [vmem:[%s0 + $0x1b0] sm:$0xff]
    %v76 = vld [vmem:[%s0 + $0x1b8] sm:$0xff]
    %v77 = vld [vmem:[%s0 + $0x1c0] sm:$0xff]
    %v78 = vld [vmem:[%s0 + $0x1c8] sm:$0xff]
    %v79 = vld [vmem:[%s0 + $0x1d0] sm:$0xff]
    %v80 = vld [vmem:[%s0 + $0x1d8] sm:$0xff]
    %v81 = vld [vmem:[%s0 + $0x1e0] sm:$0xff]
    %v82 = vld [vmem:[%s0 + $0x1e8] sm:$0xff]
    %v83 = vld [vmem:[%s0 + $0x1f0] sm:$0xff]
    %v84 = vld [vmem:[%s0 + $0x1f8] sm:$0xff]
    %v85 = vld [vmem:[%s0 + $0x200] sm:$0xff]
    %v86 = vld [vmem:[%s0 + $0x208] sm:$0xff]
    %v87 = vld [vmem:[%s0 + $0x210] sm:$0xff]
    %v88 = vld [vmem:[%s0 + $0x218] sm:$0xff]
    %v89 = vld [vmem:[%s0 + $0x220] sm:$0xff]
    %v90 = vld [vmem:[%s0 + $0x228] sm:$0xff]
    %v91 = vld [vmem:[%s0 + $0x230] sm:$0xff]
    %v92 = vld [vmem:[%s0 + $0x238] sm:$0xff]
    %v93 = vld [vmem:[%s0 + $0x240] sm:$0xff]
    %v94 = vld [vmem:[%s0 + $0x248] sm:$0xff]
    %v95 = vld [vmem:[%s0 + $0x250] sm:$0xff]
    %v96 = vld [vmem:[%s0 + $0x258] sm:$0xff]
    %v97 = vld [vmem:[%s0 + $0x260] sm:$0xff]
    %v98 = vld [vmem:[%s0 + $0x268] sm:$0xff]
    %v99 = vld [vmem:[%s0 + $0x270] sm:$0xff]
    %v100 = vld [vmem:[%s0 + $0x278] sm:$0xff]
    %v101 = vld [vmem:[%s0 + $0x280] sm:$0xff]
    %v102 = vld [vmem:[%s0 + $0x288] sm:$0xff]
    %v103 = vld [vmem:[%s0 + $0x290] sm:$0xff]
    %v104 = vld [vmem:[%s0 + $0x298] sm:$0xff]
    %v105 = vld [vmem:[%s0 + $0x2a0] sm:$0xff]
    %v106 = vld [vmem:[%s0 + $0x2a8] sm:$0xff]
    %v107 = vld [vmem:[%s0 + $0x2b0] sm:$0xff]
    %v108 = vld [vmem:[%s0 + $0x2b8] sm:$0xff]
    %v109 = vld [vmem:[%s0 + $0x2c0] sm:$0xff]
    %v110 = vld [vmem:[%s0 + $0x2c8] sm:$0xff]
    %v111 = vld [vmem:[%s0 + $0x2d0] sm:$0xff]
    %v112 = vld [vmem:[%s0 + $0x2d8] sm:$0xff]
    %v113 = vld [vmem:[%s0 + $0x2e0] sm:$0xff]
    %v114 = vld [vmem:[%s0 + $0x2e8] sm:$0xff]
    %v115 = vld [vmem:[%s0 + $0x2f0] sm:$0xff]
    %v116 = vld [vmem:[%s0 + $0x2f8] sm:$0xff]
    %v117 = vld [vmem:[%s0 + $0x300] sm:$0xff]
    %v118 = vld [vmem:[%s0 + $0x308] sm:$0xff]
    %v119 = vld [vmem:[%s0 + $0x310] sm:$0xff]
    %v120 = vld [vmem:[%s0 + $0x318] sm:$0xff]
    %v121 = vld [vmem:[%s0 + $0x320] sm:$0xff]
    %v122 = vld [vmem:[%s0 + $0x328] sm:$0xff]
    %v123 = vld [vmem:[%s0 + $0x330] sm:$0xff]
    %v124 = vld [vmem:[%s0 + $0x338] sm:$0xff]
    %v125 = vld [vmem:[%s0 + $0x340] sm:$0xff]
    %v126 = vld [vmem:[%s0 + $0x348] sm:$0xff]
    %v127 = vld [vmem:[%s0 + $0x350] sm:$0xff]
    %v128 = vld [vmem:[%s0 + $0x358] sm:$0xff]
    %v129 = vld [vmem:[%s0 + $0x360] sm:$0xff]
    %v130 = vld [vmem:[%s0 + $0x368] sm:$0xff]
    %v131 = vld [vmem:[%s0 + $0x370] sm:$0xff]
    %v132 = vld [vmem:[%s0 + $0x378] sm:$0xff]
    %v133 = vld [vmem:[%s0 + $0x380] sm:$0xff]
    %v134 = vld [vmem:[%s0 + $0x388] sm:$0xff]
    %v135 = vld [vmem:[%s0 + $0x390] sm:$0xff]
    %v136 = vld [vmem:[%s0 + $0x398] sm:$0xff]
    %v137 = vld [vmem:[%s0 + $0x3a0] sm:$0xff]
    %v138 = vld [vmem:[%s0 + $0x3a8] sm:$0xff]
    %v139 = vld [vmem:[%s0 + $0x3b0] sm:$0xff]
    %v140 = vld [vmem:[%s0 + $0x3b8] sm:$0xff]
    %v141 = vld [vmem:[%s0 + $0x3c0] sm:$0xff]
    %v142 = vld [vmem:[%s0 + $0x3c8] sm:$0xff]
    %v143 = vld [vmem:[%s0 + $0x3d0] sm:$0xff]
    %v144 = vld [vmem:[%s0 + $0x3d8] sm:$0xff]
    %v145 = vld [vmem:[%s0 + $0x3e0] sm:$0xff]
    %v146 = vld [vmem:[%s0 + $0x3e8] sm:$0xff]
    %v147 = vld [vmem:[%s0 + $0x3f0] sm:$0xff]
    %v148 = vld [vmem:[%s0 + $0x3f8] sm:$0xff]
    %v277 = vcombine.low %v21, %v23
    %v278 = vcombine.high %v21, %v23
    %v279 = vcombine.low %v25, %v27
    %v280 = vcombine.high %v25, %v27
    %v282 = vunpack.c.l.s4 1983009808
    %v283 = vunpack.c.0.s8 %v282
    %v284 = vlaneseq
    %v285 = vshrl.u32 %v284, 7
    %v286 = vsub.s32 %v283, %v285
    %v287 = vrot.slane %v277, %v286
    %v289 = vunpack.c.l.s4 1983009808
    %v290 = vunpack.c.0.s8 %v289
    %v291 = vlaneseq
    %v292 = vshrl.u32 %v291, 7
    %v293 = vsub.s32 %v290, %v292
    %v294 = vrot.slane %v278, %v293
    %v296 = vunpack.c.l.s4 1983009808
    %v297 = vunpack.c.0.s8 %v296
    %v298 = vlaneseq
    %v299 = vshrl.u32 %v298, 7
    %v300 = vsub.s32 %v297, %v299
    %v301 = vrot.slane %v279, %v300
    %v303 = vunpack.c.l.s4 1983009808
    %v304 = vunpack.c.0.s8 %v303
    %v305 = vlaneseq
    %v306 = vshrl.u32 %v305, 7
    %v307 = vsub.s32 %v304, %v306
    %v308 = vrot.slane %v280, %v307
    %v309 = vcombine.low %v287, %v301
    %v310 = vcombine.high %v287, %v301
    %v311 = vcombine.low %v294, %v308
    %v312 = vcombine.high %v294, %v308
    %v313 = vcombine.low %v22, %v24
    %v314 = vcombine.high %v22, %v24
    %v315 = vcombine.low %v26, %v28
    %v316 = vcombine.high %v26, %v28
    %v318 = vunpack.c.l.s4 1983009808
    %v319 = vunpack.c.0.s8 %v318
    %v320 = vlaneseq
    %v321 = vshrl.u32 %v320, 7
    %v322 = vsub.s32 %v319, %v321
    %v323 = vrot.slane %v313, %v322
    %v325 = vunpack.c.l.s4 1983009808
    %v326 = vunpack.c.0.s8 %v325
    %v327 = vlaneseq
    %v328 = vshrl.u32 %v327, 7
    %v329 = vsub.s32 %v326, %v328
    %v330 = vrot.slane %v314, %v329
    %v332 = vunpack.c.l.s4 1983009808
    %v333 = vunpack.c.0.s8 %v332
    %v334 = vlaneseq
    %v335 = vshrl.u32 %v334, 7
    %v336 = vsub.s32 %v333, %v335
    %v337 = vrot.slane %v315, %v336
    %v339 = vunpack.c.l.s4 1983009808
    %v340 = vunpack.c.0.s8 %v339
    %v341 = vlaneseq
    %v342 = vshrl.u32 %v341, 7
    %v343 = vsub.s32 %v340, %v342
    %v344 = vrot.slane %v316, %v343
    %v345 = vcombine.low %v323, %v337
    %v346 = vcombine.high %v323, %v337
    %v347 = vcombine.low %v330, %v344
    %v348 = vcombine.high %v330, %v344
    %v349 = vcombine.low %v29, %v31
    %v350 = vcombine.high %v29, %v31
    %v351 = vcombine.low %v33, %v35
    %v352 = vcombine.high %v33, %v35
    %v354 = vunpack.c.l.s4 1983009808
    %v355 = vunpack.c.0.s8 %v354
    %v356 = vlaneseq
    %v357 = vshrl.u32 %v356, 7
    %v358 = vsub.s32 %v355, %v357
    %v359 = vrot.slane %v349, %v358
    %v361 = vunpack.c.l.s4 1983009808
    %v362 = vunpack.c.0.s8 %v361
    %v363 = vlaneseq
    %v364 = vshrl.u32 %v363, 7
    %v365 = vsub.s32 %v362, %v364
    %v366 = vrot.slane %v350, %v365
    %v368 = vunpack.c.l.s4 1983009808
    %v369 = vunpack.c.0.s8 %v368
    %v370 = vlaneseq
    %v371 = vshrl.u32 %v370, 7
    %v372 = vsub.s32 %v369, %v371
    %v373 = vrot.slane %v351, %v372
    %v375 = vunpack.c.l.s4 1983009808
    %v376 = vunpack.c.0.s8 %v375
    %v377 = vlaneseq
    %v378 = vshrl.u32 %v377, 7
    %v379 = vsub.s32 %v376, %v378
    %v380 = vrot.slane %v352, %v379
    %v381 = vcombine.low %v359, %v373
    %v382 = vcombine.high %v359, %v373
    %v383 = vcombine.low %v366, %v380
    %v384 = vcombine.high %v366, %v380
    %v385 = vcombine.low %v30, %v32
    %v386 = vcombine.high %v30, %v32
    %v387 = vcombine.low %v34, %v36
    %v388 = vcombine.high %v34, %v36
    %v390 = vunpack.c.l.s4 1983009808
    %v391 = vunpack.c.0.s8 %v390
    %v392 = vlaneseq
    %v393 = vshrl.u32 %v392, 7
    %v394 = vsub.s32 %v391, %v393
    %v395 = vrot.slane %v385, %v394
    %v397 = vunpack.c.l.s4 1983009808
    %v398 = vunpack.c.0.s8 %v397
    %v399 = vlaneseq
    %v400 = vshrl.u32 %v399, 7
    %v401 = vsub.s32 %v398, %v400
    %v402 = vrot.slane %v386, %v401
    %v404 = vunpack.c.l.s4 1983009808
    %v405 = vunpack.c.0.s8 %v404
    %v406 = vlaneseq
    %v407 = vshrl.u32 %v406, 7
    %v408 = vsub.s32 %v405, %v407
    %v409 = vrot.slane %v387, %v408
    %v411 = vunpack.c.l.s4 1983009808
    %v412 = vunpack.c.0.s8 %v411
    %v413 = vlaneseq
    %v414 = vshrl.u32 %v413, 7
    %v415 = vsub.s32 %v412, %v414
    %v416 = vrot.slane %v388, %v415
    %v417 = vcombine.low %v395, %v409
    %v418 = vcombine.high %v395, %v409
    %v419 = vcombine.low %v402, %v416
    %v420 = vcombine.high %v402, %v416
    %v421 = vcombine.low %v37, %v39
    %v422 = vcombine.high %v37, %v39
    %v423 = vcombine.low %v41, %v43
    %v424 = vcombine.high %v41, %v43
    %v426 = vunpack.c.l.s4 1983009808
    %v427 = vunpack.c.0.s8 %v426
    %v428 = vlaneseq
    %v429 = vshrl.u32 %v428, 7
    %v430 = vsub.s32 %v427, %v429
    %v431 = vrot.slane %v421, %v430
    %v433 = vunpack.c.l.s4 1983009808
    %v434 = vunpack.c.0.s8 %v433
    %v435 = vlaneseq
    %v436 = vshrl.u32 %v435, 7
    %v437 = vsub.s32 %v434, %v436
    %v438 = vrot.slane %v422, %v437
    %v440 = vunpack.c.l.s4 1983009808
    %v441 = vunpack.c.0.s8 %v440
    %v442 = vlaneseq
    %v443 = vshrl.u32 %v442, 7
    %v444 = vsub.s32 %v441, %v443
    %v445 = vrot.slane %v423, %v444
    %v447 = vunpack.c.l.s4 1983009808
    %v448 = vunpack.c.0.s8 %v447
    %v449 = vlaneseq
    %v450 = vshrl.u32 %v449, 7
    %v451 = vsub.s32 %v448, %v450
    %v452 = vrot.slane %v424, %v451
    %v453 = vcombine.low %v431, %v445
    %v454 = vcombine.high %v431, %v445
    %v455 = vcombine.low %v438, %v452
    %v456 = vcombine.high %v438, %v452
    %v457 = vcombine.low %v38, %v40
    %v458 = vcombine.high %v38, %v40
    %v459 = vcombine.low %v42, %v44
    %v460 = vcombine.high %v42, %v44
    %v462 = vunpack.c.l.s4 1983009808
    %v463 = vunpack.c.0.s8 %v462
    %v464 = vlaneseq
    %v465 = vshrl.u32 %v464, 7
    %v466 = vsub.s32 %v463, %v465
    %v467 = vrot.slane %v457, %v466
    %v469 = vunpack.c.l.s4 1983009808
    %v470 = vunpack.c.0.s8 %v469
    %v471 = vlaneseq
    %v472 = vshrl.u32 %v471, 7
    %v473 = vsub.s32 %v470, %v472
    %v474 = vrot.slane %v458, %v473
    %v476 = vunpack.c.l.s4 1983009808
    %v477 = vunpack.c.0.s8 %v476
    %v478 = vlaneseq
    %v479 = vshrl.u32 %v478, 7
    %v480 = vsub.s32 %v477, %v479
    %v481 = vrot.slane %v459, %v480
    %v483 = vunpack.c.l.s4 1983009808
    %v484 = vunpack.c.0.s8 %v483
    %v485 = vlaneseq
    %v486 = vshrl.u32 %v485, 7
    %v487 = vsub.s32 %v484, %v486
    %v488 = vrot.slane %v460, %v487
    %v489 = vcombine.low %v467, %v481
    %v490 = vcombine.high %v467, %v481
    %v491 = vcombine.low %v474, %v488
    %v492 = vcombine.high %v474, %v488
    %v493 = vcombine.low %v45, %v47
    %v494 = vcombine.high %v45, %v47
    %v495 = vcombine.low %v49, %v51
    %v496 = vcombine.high %v49, %v51
    %v498 = vunpack.c.l.s4 1983009808
    %v499 = vunpack.c.0.s8 %v498
    %v500 = vlaneseq
    %v501 = vshrl.u32 %v500, 7
    %v502 = vsub.s32 %v499, %v501
    %v503 = vrot.slane %v493, %v502
    %v505 = vunpack.c.l.s4 1983009808
    %v506 = vunpack.c.0.s8 %v505
    %v507 = vlaneseq
    %v508 = vshrl.u32 %v507, 7
    %v509 = vsub.s32 %v506, %v508
    %v510 = vrot.slane %v494, %v509
    %v512 = vunpack.c.l.s4 1983009808
    %v513 = vunpack.c.0.s8 %v512
    %v514 = vlaneseq
    %v515 = vshrl.u32 %v514, 7
    %v516 = vsub.s32 %v513, %v515
    %v517 = vrot.slane %v495, %v516
    %v519 = vunpack.c.l.s4 1983009808
    %v520 = vunpack.c.0.s8 %v519
    %v521 = vlaneseq
    %v522 = vshrl.u32 %v521, 7
    %v523 = vsub.s32 %v520, %v522
    %v524 = vrot.slane %v496, %v523
    %v525 = vcombine.low %v503, %v517
    %v526 = vcombine.high %v503, %v517
    %v527 = vcombine.low %v510, %v524
    %v528 = vcombine.high %v510, %v524
    %v529 = vcombine.low %v46, %v48
    %v530 = vcombine.high %v46, %v48
    %v531 = vcombine.low %v50, %v52
    %v532 = vcombine.high %v50, %v52
    %v534 = vunpack.c.l.s4 1983009808
    %v535 = vunpack.c.0.s8 %v534
    %v536 = vlaneseq
    %v537 = vshrl.u32 %v536, 7
    %v538 = vsub.s32 %v535, %v537
    %v539 = vrot.slane %v529, %v538
    %v541 = vunpack.c.l.s4 1983009808
    %v542 = vunpack.c.0.s8 %v541
    %v543 = vlaneseq
    %v544 = vshrl.u32 %v543, 7
    %v545 = vsub.s32 %v542, %v544
    %v546 = vrot.slane %v530, %v545
    %v548 = vunpack.c.l.s4 1983009808
    %v549 = vunpack.c.0.s8 %v548
    %v550 = vlaneseq
    %v551 = vshrl.u32 %v550, 7
    %v552 = vsub.s32 %v549, %v551
    %v553 = vrot.slane %v531, %v552
    %v555 = vunpack.c.l.s4 1983009808
    %v556 = vunpack.c.0.s8 %v555
    %v557 = vlaneseq
    %v558 = vshrl.u32 %v557, 7
    %v559 = vsub.s32 %v556, %v558
    %v560 = vrot.slane %v532, %v559
    %v561 = vcombine.low %v539, %v553
    %v562 = vcombine.high %v539, %v553
    %v563 = vcombine.low %v546, %v560
    %v564 = vcombine.high %v546, %v560
    %v565 = vcombine.low %v53, %v55
    %v566 = vcombine.high %v53, %v55
    %v567 = vcombine.low %v57, %v59
    %v568 = vcombine.high %v57, %v59
    %v570 = vunpack.c.l.s4 1983009808
    %v571 = vunpack.c.0.s8 %v570
    %v572 = vlaneseq
    %v573 = vshrl.u32 %v572, 7
    %v574 = vsub.s32 %v571, %v573
    %v575 = vrot.slane %v565, %v574
    %v577 = vunpack.c.l.s4 1983009808
    %v578 = vunpack.c.0.s8 %v577
    %v579 = vlaneseq
    %v580 = vshrl.u32 %v579, 7
    %v581 = vsub.s32 %v578, %v580
    %v582 = vrot.slane %v566, %v581
    %v584 = vunpack.c.l.s4 1983009808
    %v585 = vunpack.c.0.s8 %v584
    %v586 = vlaneseq
    %v587 = vshrl.u32 %v586, 7
    %v588 = vsub.s32 %v585, %v587
    %v589 = vrot.slane %v567, %v588
    %v591 = vunpack.c.l.s4 1983009808
    %v592 = vunpack.c.0.s8 %v591
    %v593 = vlaneseq
    %v594 = vshrl.u32 %v593, 7
    %v595 = vsub.s32 %v592, %v594
    %v596 = vrot.slane %v568, %v595
    %v597 = vcombine.low %v575, %v589
    %v598 = vcombine.high %v575, %v589
    %v599 = vcombine.low %v582, %v596
    %v600 = vcombine.high %v582, %v596
    %v601 = vcombine.low %v54, %v56
    %v602 = vcombine.high %v54, %v56
    %v603 = vcombine.low %v58, %v60
    %v604 = vcombine.high %v58, %v60
    %v606 = vunpack.c.l.s4 1983009808
    %v607 = vunpack.c.0.s8 %v606
    %v608 = vlaneseq
    %v609 = vshrl.u32 %v608, 7
    %v610 = vsub.s32 %v607, %v609
    %v611 = vrot.slane %v601, %v610
    %v613 = vunpack.c.l.s4 1983009808
    %v614 = vunpack.c.0.s8 %v613
    %v615 = vlaneseq
    %v616 = vshrl.u32 %v615, 7
    %v617 = vsub.s32 %v614, %v616
    %v618 = vrot.slane %v602, %v617
    %v620 = vunpack.c.l.s4 1983009808
    %v621 = vunpack.c.0.s8 %v620
    %v622 = vlaneseq
    %v623 = vshrl.u32 %v622, 7
    %v624 = vsub.s32 %v621, %v623
    %v625 = vrot.slane %v603, %v624
    %v627 = vunpack.c.l.s4 1983009808
    %v628 = vunpack.c.0.s8 %v627
    %v629 = vlaneseq
    %v630 = vshrl.u32 %v629, 7
    %v631 = vsub.s32 %v628, %v630
    %v632 = vrot.slane %v604, %v631
    %v633 = vcombine.low %v611, %v625
    %v634 = vcombine.high %v611, %v625
    %v635 = vcombine.low %v618, %v632
    %v636 = vcombine.high %v618, %v632
    %v637 = vcombine.low %v61, %v63
    %v638 = vcombine.high %v61, %v63
    %v639 = vcombine.low %v65, %v67
    %v640 = vcombine.high %v65, %v67
    %v642 = vunpack.c.l.s4 1983009808
    %v643 = vunpack.c.0.s8 %v642
    %v644 = vlaneseq
    %v645 = vshrl.u32 %v644, 7
    %v646 = vsub.s32 %v643, %v645
    %v647 = vrot.slane %v637, %v646
    %v649 = vunpack.c.l.s4 1983009808
    %v650 = vunpack.c.0.s8 %v649
    %v651 = vlaneseq
    %v652 = vshrl.u32 %v651, 7
    %v653 = vsub.s32 %v650, %v652
    %v654 = vrot.slane %v638, %v653
    %v656 = vunpack.c.l.s4 1983009808
    %v657 = vunpack.c.0.s8 %v656
    %v658 = vlaneseq
    %v659 = vshrl.u32 %v658, 7
    %v660 = vsub.s32 %v657, %v659
    %v661 = vrot.slane %v639, %v660
    %v663 = vunpack.c.l.s4 1983009808
    %v664 = vunpack.c.0.s8 %v663
    %v665 = vlaneseq
    %v666 = vshrl.u32 %v665, 7
    %v667 = vsub.s32 %v664, %v666
    %v668 = vrot.slane %v640, %v667
    %v669 = vcombine.low %v647, %v661
    %v670 = vcombine.high %v647, %v661
    %v671 = vcombine.low %v654, %v668
    %v672 = vcombine.high %v654, %v668
    %v673 = vcombine.low %v62, %v64
    %v674 = vcombine.high %v62, %v64
    %v675 = vcombine.low %v66, %v68
    %v676 = vcombine.high %v66, %v68
    %v678 = vunpack.c.l.s4 1983009808
    %v679 = vunpack.c.0.s8 %v678
    %v680 = vlaneseq
    %v681 = vshrl.u32 %v680, 7
    %v682 = vsub.s32 %v679, %v681
    %v683 = vrot.slane %v673, %v682
    %v685 = vunpack.c.l.s4 1983009808
    %v686 = vunpack.c.0.s8 %v685
    %v687 = vlaneseq
    %v688 = vshrl.u32 %v687, 7
    %v689 = vsub.s32 %v686, %v688
    %v690 = vrot.slane %v674, %v689
    %v692 = vunpack.c.l.s4 1983009808
    %v693 = vunpack.c.0.s8 %v692
    %v694 = vlaneseq
    %v695 = vshrl.u32 %v694, 7
    %v696 = vsub.s32 %v693, %v695
    %v697 = vrot.slane %v675, %v696
    %v699 = vunpack.c.l.s4 1983009808
    %v700 = vunpack.c.0.s8 %v699
    %v701 = vlaneseq
    %v702 = vshrl.u32 %v701, 7
    %v703 = vsub.s32 %v700, %v702
    %v704 = vrot.slane %v676, %v703
    %v705 = vcombine.low %v683, %v697
    %v706 = vcombine.high %v683, %v697
    %v707 = vcombine.low %v690, %v704
    %v708 = vcombine.high %v690, %v704
    %v709 = vcombine.low %v69, %v71
    %v710 = vcombine.high %v69, %v71
    %v711 = vcombine.low %v73, %v75
    %v712 = vcombine.high %v73, %v75
    %v714 = vunpack.c.l.s4 1983009808
    %v715 = vunpack.c.0.s8 %v714
    %v716 = vlaneseq
    %v717 = vshrl.u32 %v716, 7
    %v718 = vsub.s32 %v715, %v717
    %v719 = vrot.slane %v709, %v718
    %v721 = vunpack.c.l.s4 1983009808
    %v722 = vunpack.c.0.s8 %v721
    %v723 = vlaneseq
    %v724 = vshrl.u32 %v723, 7
    %v725 = vsub.s32 %v722, %v724
    %v726 = vrot.slane %v710, %v725
    %v728 = vunpack.c.l.s4 1983009808
    %v729 = vunpack.c.0.s8 %v728
    %v730 = vlaneseq
    %v731 = vshrl.u32 %v730, 7
    %v732 = vsub.s32 %v729, %v731
    %v733 = vrot.slane %v711, %v732
    %v735 = vunpack.c.l.s4 1983009808
    %v736 = vunpack.c.0.s8 %v735
    %v737 = vlaneseq
    %v738 = vshrl.u32 %v737, 7
    %v739 = vsub.s32 %v736, %v738
    %v740 = vrot.slane %v712, %v739
    %v741 = vcombine.low %v719, %v733
    %v742 = vcombine.high %v719, %v733
    %v743 = vcombine.low %v726, %v740
    %v744 = vcombine.high %v726, %v740
    %v745 = vcombine.low %v70, %v72
    %v746 = vcombine.high %v70, %v72
    %v747 = vcombine.low %v74, %v76
    %v748 = vcombine.high %v74, %v76
    %v750 = vunpack.c.l.s4 1983009808
    %v751 = vunpack.c.0.s8 %v750
    %v752 = vlaneseq
    %v753 = vshrl.u32 %v752, 7
    %v754 = vsub.s32 %v751, %v753
    %v755 = vrot.slane %v745, %v754
    %v757 = vunpack.c.l.s4 1983009808
    %v758 = vunpack.c.0.s8 %v757
    %v759 = vlaneseq
    %v760 = vshrl.u32 %v759, 7
    %v761 = vsub.s32 %v758, %v760
    %v762 = vrot.slane %v746, %v761
    %v764 = vunpack.c.l.s4 1983009808
    %v765 = vunpack.c.0.s8 %v764
    %v766 = vlaneseq
    %v767 = vshrl.u32 %v766, 7
    %v768 = vsub.s32 %v765, %v767
    %v769 = vrot.slane %v747, %v768
    %v771 = vunpack.c.l.s4 1983009808
    %v772 = vunpack.c.0.s8 %v771
    %v773 = vlaneseq
    %v774 = vshrl.u32 %v773, 7
    %v775 = vsub.s32 %v772, %v774
    %v776 = vrot.slane %v748, %v775
    %v777 = vcombine.low %v755, %v769
    %v778 = vcombine.high %v755, %v769
    %v779 = vcombine.low %v762, %v776
    %v780 = vcombine.high %v762, %v776
    %v781 = vcombine.low %v77, %v79
    %v782 = vcombine.high %v77, %v79
    %v783 = vcombine.low %v81, %v83
    %v784 = vcombine.high %v81, %v83
    %v786 = vunpack.c.l.s4 1983009808
    %v787 = vunpack.c.0.s8 %v786
    %v788 = vlaneseq
    %v789 = vshrl.u32 %v788, 7
    %v790 = vsub.s32 %v787, %v789
    %v791 = vrot.slane %v781, %v790
    %v793 = vunpack.c.l.s4 1983009808
    %v794 = vunpack.c.0.s8 %v793
    %v795 = vlaneseq
    %v796 = vshrl.u32 %v795, 7
    %v797 = vsub.s32 %v794, %v796
    %v798 = vrot.slane %v782, %v797
    %v800 = vunpack.c.l.s4 1983009808
    %v801 = vunpack.c.0.s8 %v800
    %v802 = vlaneseq
    %v803 = vshrl.u32 %v802, 7
    %v804 = vsub.s32 %v801, %v803
    %v805 = vrot.slane %v783, %v804
    %v807 = vunpack.c.l.s4 1983009808
    %v808 = vunpack.c.0.s8 %v807
    %v809 = vlaneseq
    %v810 = vshrl.u32 %v809, 7
    %v811 = vsub.s32 %v808, %v810
    %v812 = vrot.slane %v784, %v811
    %v813 = vcombine.low %v791, %v805
    %v814 = vcombine.high %v791, %v805
    %v815 = vcombine.low %v798, %v812
    %v816 = vcombine.high %v798, %v812
    %v817 = vcombine.low %v78, %v80
    %v818 = vcombine.high %v78, %v80
    %v819 = vcombine.low %v82, %v84
    %v820 = vcombine.high %v82, %v84
    %v822 = vunpack.c.l.s4 1983009808
    %v823 = vunpack.c.0.s8 %v822
    %v824 = vlaneseq
    %v825 = vshrl.u32 %v824, 7
    %v826 = vsub.s32 %v823, %v825
    %v827 = vrot.slane %v817, %v826
    %v829 = vunpack.c.l.s4 1983009808
    %v830 = vunpack.c.0.s8 %v829
    %v831 = vlaneseq
    %v832 = vshrl.u32 %v831, 7
    %v833 = vsub.s32 %v830, %v832
    %v834 = vrot.slane %v818, %v833
    %v836 = vunpack.c.l.s4 1983009808
    %v837 = vunpack.c.0.s8 %v836
    %v838 = vlaneseq
    %v839 = vshrl.u32 %v838, 7
    %v840 = vsub.s32 %v837, %v839
    %v841 = vrot.slane %v819, %v840
    %v843 = vunpack.c.l.s4 1983009808
    %v844 = vunpack.c.0.s8 %v843
    %v845 = vlaneseq
    %v846 = vshrl.u32 %v845, 7
    %v847 = vsub.s32 %v844, %v846
    %v848 = vrot.slane %v820, %v847
    %v849 = vcombine.low %v827, %v841
    %v850 = vcombine.high %v827, %v841
    %v851 = vcombine.low %v834, %v848
    %v852 = vcombine.high %v834, %v848
    %v853 = vcombine.low %v85, %v87
    %v854 = vcombine.high %v85, %v87
    %v855 = vcombine.low %v89, %v91
    %v856 = vcombine.high %v89, %v91
    %v858 = vunpack.c.l.s4 1983009808
    %v859 = vunpack.c.0.s8 %v858
    %v860 = vlaneseq
    %v861 = vshrl.u32 %v860, 7
    %v862 = vsub.s32 %v859, %v861
    %v863 = vrot.slane %v853, %v862
    %v865 = vunpack.c.l.s4 1983009808
    %v866 = vunpack.c.0.s8 %v865
    %v867 = vlaneseq
    %v868 = vshrl.u32 %v867, 7
    %v869 = vsub.s32 %v866, %v868
    %v870 = vrot.slane %v854, %v869
    %v872 = vunpack.c.l.s4 1983009808
    %v873 = vunpack.c.0.s8 %v872
    %v874 = vlaneseq
    %v875 = vshrl.u32 %v874, 7
    %v876 = vsub.s32 %v873, %v875
    %v877 = vrot.slane %v855, %v876
    %v879 = vunpack.c.l.s4 1983009808
    %v880 = vunpack.c.0.s8 %v879
    %v881 = vlaneseq
    %v882 = vshrl.u32 %v881, 7
    %v883 = vsub.s32 %v880, %v882
    %v884 = vrot.slane %v856, %v883
    %v885 = vcombine.low %v863, %v877
    %v886 = vcombine.high %v863, %v877
    %v887 = vcombine.low %v870, %v884
    %v888 = vcombine.high %v870, %v884
    %v889 = vcombine.low %v86, %v88
    %v890 = vcombine.high %v86, %v88
    %v891 = vcombine.low %v90, %v92
    %v892 = vcombine.high %v90, %v92
    %v894 = vunpack.c.l.s4 1983009808
    %v895 = vunpack.c.0.s8 %v894
    %v896 = vlaneseq
    %v897 = vshrl.u32 %v896, 7
    %v898 = vsub.s32 %v895, %v897
    %v899 = vrot.slane %v889, %v898
    %v901 = vunpack.c.l.s4 1983009808
    %v902 = vunpack.c.0.s8 %v901
    %v903 = vlaneseq
    %v904 = vshrl.u32 %v903, 7
    %v905 = vsub.s32 %v902, %v904
    %v906 = vrot.slane %v890, %v905
    %v908 = vunpack.c.l.s4 1983009808
    %v909 = vunpack.c.0.s8 %v908
    %v910 = vlaneseq
    %v911 = vshrl.u32 %v910, 7
    %v912 = vsub.s32 %v909, %v911
    %v913 = vrot.slane %v891, %v912
    %v915 = vunpack.c.l.s4 1983009808
    %v916 = vunpack.c.0.s8 %v915
    %v917 = vlaneseq
    %v918 = vshrl.u32 %v917, 7
    %v919 = vsub.s32 %v916, %v918
    %v920 = vrot.slane %v892, %v919
    %v921 = vcombine.low %v899, %v913
    %v922 = vcombine.high %v899, %v913
    %v923 = vcombine.low %v906, %v920
    %v924 = vcombine.high %v906, %v920
    %v925 = vcombine.low %v93, %v95
    %v926 = vcombine.high %v93, %v95
    %v927 = vcombine.low %v97, %v99
    %v928 = vcombine.high %v97, %v99
    %v930 = vunpack.c.l.s4 1983009808
    %v931 = vunpack.c.0.s8 %v930
    %v932 = vlaneseq
    %v933 = vshrl.u32 %v932, 7
    %v934 = vsub.s32 %v931, %v933
    %v935 = vrot.slane %v925, %v934
    %v937 = vunpack.c.l.s4 1983009808
    %v938 = vunpack.c.0.s8 %v937
    %v939 = vlaneseq
    %v940 = vshrl.u32 %v939, 7
    %v941 = vsub.s32 %v938, %v940
    %v942 = vrot.slane %v926, %v941
    %v944 = vunpack.c.l.s4 1983009808
    %v945 = vunpack.c.0.s8 %v944
    %v946 = vlaneseq
    %v947 = vshrl.u32 %v946, 7
    %v948 = vsub.s32 %v945, %v947
    %v949 = vrot.slane %v927, %v948
    %v951 = vunpack.c.l.s4 1983009808
    %v952 = vunpack.c.0.s8 %v951
    %v953 = vlaneseq
    %v954 = vshrl.u32 %v953, 7
    %v955 = vsub.s32 %v952, %v954
    %v956 = vrot.slane %v928, %v955
    %v957 = vcombine.low %v935, %v949
    %v958 = vcombine.high %v935, %v949
    %v959 = vcombine.low %v942, %v956
    %v960 = vcombine.high %v942, %v956
    %v961 = vcombine.low %v94, %v96
    %v962 = vcombine.high %v94, %v96
    %v963 = vcombine.low %v98, %v100
    %v964 = vcombine.high %v98, %v100
    %v966 = vunpack.c.l.s4 1983009808
    %v967 = vunpack.c.0.s8 %v966
    %v968 = vlaneseq
    %v969 = vshrl.u32 %v968, 7
    %v970 = vsub.s32 %v967, %v969
    %v971 = vrot.slane %v961, %v970
    %v973 = vunpack.c.l.s4 1983009808
    %v974 = vunpack.c.0.s8 %v973
    %v975 = vlaneseq
    %v976 = vshrl.u32 %v975, 7
    %v977 = vsub.s32 %v974, %v976
    %v978 = vrot.slane %v962, %v977
    %v980 = vunpack.c.l.s4 1983009808
    %v981 = vunpack.c.0.s8 %v980
    %v982 = vlaneseq
    %v983 = vshrl.u32 %v982, 7
    %v984 = vsub.s32 %v981, %v983
    %v985 = vrot.slane %v963, %v984
    %v987 = vunpack.c.l.s4 1983009808
    %v988 = vunpack.c.0.s8 %v987
    %v989 = vlaneseq
    %v990 = vshrl.u32 %v989, 7
    %v991 = vsub.s32 %v988, %v990
    %v992 = vrot.slane %v964, %v991
    %v993 = vcombine.low %v971, %v985
    %v994 = vcombine.high %v971, %v985
    %v995 = vcombine.low %v978, %v992
    %v996 = vcombine.high %v978, %v992
    %v997 = vcombine.low %v101, %v103
    %v998 = vcombine.high %v101, %v103
    %v999 = vcombine.low %v105, %v107
    %v1000 = vcombine.high %v105, %v107
    %v1002 = vunpack.c.l.s4 1983009808
    %v1003 = vunpack.c.0.s8 %v1002
    %v1004 = vlaneseq
    %v1005 = vshrl.u32 %v1004, 7
    %v1006 = vsub.s32 %v1003, %v1005
    %v1007 = vrot.slane %v997, %v1006
    %v1009 = vunpack.c.l.s4 1983009808
    %v1010 = vunpack.c.0.s8 %v1009
    %v1011 = vlaneseq
    %v1012 = vshrl.u32 %v1011, 7
    %v1013 = vsub.s32 %v1010, %v1012
    %v1014 = vrot.slane %v998, %v1013
    %v1016 = vunpack.c.l.s4 1983009808
    %v1017 = vunpack.c.0.s8 %v1016
    %v1018 = vlaneseq
    %v1019 = vshrl.u32 %v1018, 7
    %v1020 = vsub.s32 %v1017, %v1019
    %v1021 = vrot.slane %v999, %v1020
    %v1023 = vunpack.c.l.s4 1983009808
    %v1024 = vunpack.c.0.s8 %v1023
    %v1025 = vlaneseq
    %v1026 = vshrl.u32 %v1025, 7
    %v1027 = vsub.s32 %v1024, %v1026
    %v1028 = vrot.slane %v1000, %v1027
    %v1029 = vcombine.low %v1007, %v1021
    %v1030 = vcombine.high %v1007, %v1021
    %v1031 = vcombine.low %v1014, %v1028
    %v1032 = vcombine.high %v1014, %v1028
    %v1033 = vcombine.low %v102, %v104
    %v1034 = vcombine.high %v102, %v104
    %v1035 = vcombine.low %v106, %v108
    %v1036 = vcombine.high %v106, %v108
    %v1038 = vunpack.c.l.s4 1983009808
    %v1039 = vunpack.c.0.s8 %v1038
    %v1040 = vlaneseq
    %v1041 = vshrl.u32 %v1040, 7
    %v1042 = vsub.s32 %v1039, %v1041
    %v1043 = vrot.slane %v1033, %v1042
    %v1045 = vunpack.c.l.s4 1983009808
    %v1046 = vunpack.c.0.s8 %v1045
    %v1047 = vlaneseq
    %v1048 = vshrl.u32 %v1047, 7
    %v1049 = vsub.s32 %v1046, %v1048
    %v1050 = vrot.slane %v1034, %v1049
    %v1052 = vunpack.c.l.s4 1983009808
    %v1053 = vunpack.c.0.s8 %v1052
    %v1054 = vlaneseq
    %v1055 = vshrl.u32 %v1054, 7
    %v1056 = vsub.s32 %v1053, %v1055
    %v1057 = vrot.slane %v1035, %v1056
    %v1059 = vunpack.c.l.s4 1983009808
    %v1060 = vunpack.c.0.s8 %v1059
    %v1061 = vlaneseq
    %v1062 = vshrl.u32 %v1061, 7
    %v1063 = vsub.s32 %v1060, %v1062
    %v1064 = vrot.slane %v1036, %v1063
    %v1065 = vcombine.low %v1043, %v1057
    %v1066 = vcombine.high %v1043, %v1057
    %v1067 = vcombine.low %v1050, %v1064
    %v1068 = vcombine.high %v1050, %v1064
    %v1069 = vcombine.low %v109, %v111
    %v1070 = vcombine.high %v109, %v111
    %v1071 = vcombine.low %v113, %v115
    %v1072 = vcombine.high %v113, %v115
    %v1074 = vunpack.c.l.s4 1983009808
    %v1075 = vunpack.c.0.s8 %v1074
    %v1076 = vlaneseq
    %v1077 = vshrl.u32 %v1076, 7
    %v1078 = vsub.s32 %v1075, %v1077
    %v1079 = vrot.slane %v1069, %v1078
    %v1081 = vunpack.c.l.s4 1983009808
    %v1082 = vunpack.c.0.s8 %v1081
    %v1083 = vlaneseq
    %v1084 = vshrl.u32 %v1083, 7
    %v1085 = vsub.s32 %v1082, %v1084
    %v1086 = vrot.slane %v1070, %v1085
    %v1088 = vunpack.c.l.s4 1983009808
    %v1089 = vunpack.c.0.s8 %v1088
    %v1090 = vlaneseq
    %v1091 = vshrl.u32 %v1090, 7
    %v1092 = vsub.s32 %v1089, %v1091
    %v1093 = vrot.slane %v1071, %v1092
    %v1095 = vunpack.c.l.s4 1983009808
    %v1096 = vunpack.c.0.s8 %v1095
    %v1097 = vlaneseq
    %v1098 = vshrl.u32 %v1097, 7
    %v1099 = vsub.s32 %v1096, %v1098
    %v1100 = vrot.slane %v1072, %v1099
    %v1101 = vcombine.low %v1079, %v1093
    %v1102 = vcombine.high %v1079, %v1093
    %v1103 = vcombine.low %v1086, %v1100
    %v1104 = vcombine.high %v1086, %v1100
    %v1105 = vcombine.low %v110, %v112
    %v1106 = vcombine.high %v110, %v112
    %v1107 = vcombine.low %v114, %v116
    %v1108 = vcombine.high %v114, %v116
    %v1110 = vunpack.c.l.s4 1983009808
    %v1111 = vunpack.c.0.s8 %v1110
    %v1112 = vlaneseq
    %v1113 = vshrl.u32 %v1112, 7
    %v1114 = vsub.s32 %v1111, %v1113
    %v1115 = vrot.slane %v1105, %v1114
    %v1117 = vunpack.c.l.s4 1983009808
    %v1118 = vunpack.c.0.s8 %v1117
    %v1119 = vlaneseq
    %v1120 = vshrl.u32 %v1119, 7
    %v1121 = vsub.s32 %v1118, %v1120
    %v1122 = vrot.slane %v1106, %v1121
    %v1124 = vunpack.c.l.s4 1983009808
    %v1125 = vunpack.c.0.s8 %v1124
    %v1126 = vlaneseq
    %v1127 = vshrl.u32 %v1126, 7
    %v1128 = vsub.s32 %v1125, %v1127
    %v1129 = vrot.slane %v1107, %v1128
    %v1131 = vunpack.c.l.s4 1983009808
    %v1132 = vunpack.c.0.s8 %v1131
    %v1133 = vlaneseq
    %v1134 = vshrl.u32 %v1133, 7
    %v1135 = vsub.s32 %v1132, %v1134
    %v1136 = vrot.slane %v1108, %v1135
    %v1137 = vcombine.low %v1115, %v1129
    %v1138 = vcombine.high %v1115, %v1129
    %v1139 = vcombine.low %v1122, %v1136
    %v1140 = vcombine.high %v1122, %v1136
    %v1141 = vcombine.low %v117, %v119
    %v1142 = vcombine.high %v117, %v119
    %v1143 = vcombine.low %v121, %v123
    %v1144 = vcombine.high %v121, %v123
    %v1146 = vunpack.c.l.s4 1983009808
    %v1147 = vunpack.c.0.s8 %v1146
    %v1148 = vlaneseq
    %v1149 = vshrl.u32 %v1148, 7
    %v1150 = vsub.s32 %v1147, %v1149
    %v1151 = vrot.slane %v1141, %v1150
    %v1153 = vunpack.c.l.s4 1983009808
    %v1154 = vunpack.c.0.s8 %v1153
    %v1155 = vlaneseq
    %v1156 = vshrl.u32 %v1155, 7
    %v1157 = vsub.s32 %v1154, %v1156
    %v1158 = vrot.slane %v1142, %v1157
    %v1160 = vunpack.c.l.s4 1983009808
    %v1161 = vunpack.c.0.s8 %v1160
    %v1162 = vlaneseq
    %v1163 = vshrl.u32 %v1162, 7
    %v1164 = vsub.s32 %v1161, %v1163
    %v1165 = vrot.slane %v1143, %v1164
    %v1167 = vunpack.c.l.s4 1983009808
    %v1168 = vunpack.c.0.s8 %v1167
    %v1169 = vlaneseq
    %v1170 = vshrl.u32 %v1169, 7
    %v1171 = vsub.s32 %v1168, %v1170
    %v1172 = vrot.slane %v1144, %v1171
    %v1173 = vcombine.low %v1151, %v1165
    %v1174 = vcombine.high %v1151, %v1165
    %v1175 = vcombine.low %v1158, %v1172
    %v1176 = vcombine.high %v1158, %v1172
    %v1177 = vcombine.low %v118, %v120
    %v1178 = vcombine.high %v118, %v120
    %v1179 = vcombine.low %v122, %v124
    %v1180 = vcombine.high %v122, %v124
    %v1182 = vunpack.c.l.s4 1983009808
    %v1183 = vunpack.c.0.s8 %v1182
    %v1184 = vlaneseq
    %v1185 = vshrl.u32 %v1184, 7
    %v1186 = vsub.s32 %v1183, %v1185
    %v1187 = vrot.slane %v1177, %v1186
    %v1189 = vunpack.c.l.s4 1983009808
    %v1190 = vunpack.c.0.s8 %v1189
    %v1191 = vlaneseq
    %v1192 = vshrl.u32 %v1191, 7
    %v1193 = vsub.s32 %v1190, %v1192
    %v1194 = vrot.slane %v1178, %v1193
    %v1196 = vunpack.c.l.s4 1983009808
    %v1197 = vunpack.c.0.s8 %v1196
    %v1198 = vlaneseq
    %v1199 = vshrl.u32 %v1198, 7
    %v1200 = vsub.s32 %v1197, %v1199
    %v1201 = vrot.slane %v1179, %v1200
    %v1203 = vunpack.c.l.s4 1983009808
    %v1204 = vunpack.c.0.s8 %v1203
    %v1205 = vlaneseq
    %v1206 = vshrl.u32 %v1205, 7
    %v1207 = vsub.s32 %v1204, %v1206
    %v1208 = vrot.slane %v1180, %v1207
    %v1209 = vcombine.low %v1187, %v1201
    %v1210 = vcombine.high %v1187, %v1201
    %v1211 = vcombine.low %v1194, %v1208
    %v1212 = vcombine.high %v1194, %v1208
    %v1213 = vcombine.low %v125, %v127
    %v1214 = vcombine.high %v125, %v127
    %v1215 = vcombine.low %v129, %v131
    %v1216 = vcombine.high %v129, %v131
    %v1218 = vunpack.c.l.s4 1983009808
    %v1219 = vunpack.c.0.s8 %v1218
    %v1220 = vlaneseq
    %v1221 = vshrl.u32 %v1220, 7
    %v1222 = vsub.s32 %v1219, %v1221
    %v1223 = vrot.slane %v1213, %v1222
    %v1225 = vunpack.c.l.s4 1983009808
    %v1226 = vunpack.c.0.s8 %v1225
    %v1227 = vlaneseq
    %v1228 = vshrl.u32 %v1227, 7
    %v1229 = vsub.s32 %v1226, %v1228
    %v1230 = vrot.slane %v1214, %v1229
    %v1232 = vunpack.c.l.s4 1983009808
    %v1233 = vunpack.c.0.s8 %v1232
    %v1234 = vlaneseq
    %v1235 = vshrl.u32 %v1234, 7
    %v1236 = vsub.s32 %v1233, %v1235
    %v1237 = vrot.slane %v1215, %v1236
    %v1239 = vunpack.c.l.s4 1983009808
    %v1240 = vunpack.c.0.s8 %v1239
    %v1241 = vlaneseq
    %v1242 = vshrl.u32 %v1241, 7
    %v1243 = vsub.s32 %v1240, %v1242
    %v1244 = vrot.slane %v1216, %v1243
    %v1245 = vcombine.low %v1223, %v1237
    %v1246 = vcombine.high %v1223, %v1237
    %v1247 = vcombine.low %v1230, %v1244
    %v1248 = vcombine.high %v1230, %v1244
    %v1249 = vcombine.low %v126, %v128
    %v1250 = vcombine.high %v126, %v128
    %v1251 = vcombine.low %v130, %v132
    %v1252 = vcombine.high %v130, %v132
    %v1254 = vunpack.c.l.s4 1983009808
    %v1255 = vunpack.c.0.s8 %v1254
    %v1256 = vlaneseq
    %v1257 = vshrl.u32 %v1256, 7
    %v1258 = vsub.s32 %v1255, %v1257
    %v1259 = vrot.slane %v1249, %v1258
    %v1261 = vunpack.c.l.s4 1983009808
    %v1262 = vunpack.c.0.s8 %v1261
    %v1263 = vlaneseq
    %v1264 = vshrl.u32 %v1263, 7
    %v1265 = vsub.s32 %v1262, %v1264
    %v1266 = vrot.slane %v1250, %v1265
    %v1268 = vunpack.c.l.s4 1983009808
    %v1269 = vunpack.c.0.s8 %v1268
    %v1270 = vlaneseq
    %v1271 = vshrl.u32 %v1270, 7
    %v1272 = vsub.s32 %v1269, %v1271
    %v1273 = vrot.slane %v1251, %v1272
    %v1275 = vunpack.c.l.s4 1983009808
    %v1276 = vunpack.c.0.s8 %v1275
    %v1277 = vlaneseq
    %v1278 = vshrl.u32 %v1277, 7
    %v1279 = vsub.s32 %v1276, %v1278
    %v1280 = vrot.slane %v1252, %v1279
    %v1281 = vcombine.low %v1259, %v1273
    %v1282 = vcombine.high %v1259, %v1273
    %v1283 = vcombine.low %v1266, %v1280
    %v1284 = vcombine.high %v1266, %v1280
    %v1285 = vcombine.low %v133, %v135
    %v1286 = vcombine.high %v133, %v135
    %v1287 = vcombine.low %v137, %v139
    %v1288 = vcombine.high %v137, %v139
    %v1290 = vunpack.c.l.s4 1983009808
    %v1291 = vunpack.c.0.s8 %v1290
    %v1292 = vlaneseq
    %v1293 = vshrl.u32 %v1292, 7
    %v1294 = vsub.s32 %v1291, %v1293
    %v1295 = vrot.slane %v1285, %v1294
    %v1297 = vunpack.c.l.s4 1983009808
    %v1298 = vunpack.c.0.s8 %v1297
    %v1299 = vlaneseq
    %v1300 = vshrl.u32 %v1299, 7
    %v1301 = vsub.s32 %v1298, %v1300
    %v1302 = vrot.slane %v1286, %v1301
    %v1304 = vunpack.c.l.s4 1983009808
    %v1305 = vunpack.c.0.s8 %v1304
    %v1306 = vlaneseq
    %v1307 = vshrl.u32 %v1306, 7
    %v1308 = vsub.s32 %v1305, %v1307
    %v1309 = vrot.slane %v1287, %v1308
    %v1311 = vunpack.c.l.s4 1983009808
    %v1312 = vunpack.c.0.s8 %v1311
    %v1313 = vlaneseq
    %v1314 = vshrl.u32 %v1313, 7
    %v1315 = vsub.s32 %v1312, %v1314
    %v1316 = vrot.slane %v1288, %v1315
    %v1317 = vcombine.low %v1295, %v1309
    %v1318 = vcombine.high %v1295, %v1309
    %v1319 = vcombine.low %v1302, %v1316
    %v1320 = vcombine.high %v1302, %v1316
    %v1321 = vcombine.low %v134, %v136
    %v1322 = vcombine.high %v134, %v136
    %v1323 = vcombine.low %v138, %v140
    %v1324 = vcombine.high %v138, %v140
    %v1326 = vunpack.c.l.s4 1983009808
    %v1327 = vunpack.c.0.s8 %v1326
    %v1328 = vlaneseq
    %v1329 = vshrl.u32 %v1328, 7
    %v1330 = vsub.s32 %v1327, %v1329
    %v1331 = vrot.slane %v1321, %v1330
    %v1333 = vunpack.c.l.s4 1983009808
    %v1334 = vunpack.c.0.s8 %v1333
    %v1335 = vlaneseq
    %v1336 = vshrl.u32 %v1335, 7
    %v1337 = vsub.s32 %v1334, %v1336
    %v1338 = vrot.slane %v1322, %v1337
    %v1340 = vunpack.c.l.s4 1983009808
    %v1341 = vunpack.c.0.s8 %v1340
    %v1342 = vlaneseq
    %v1343 = vshrl.u32 %v1342, 7
    %v1344 = vsub.s32 %v1341, %v1343
    %v1345 = vrot.slane %v1323, %v1344
    %v1347 = vunpack.c.l.s4 1983009808
    %v1348 = vunpack.c.0.s8 %v1347
    %v1349 = vlaneseq
    %v1350 = vshrl.u32 %v1349, 7
    %v1351 = vsub.s32 %v1348, %v1350
    %v1352 = vrot.slane %v1324, %v1351
    %v1353 = vcombine.low %v1331, %v1345
    %v1354 = vcombine.high %v1331, %v1345
    %v1355 = vcombine.low %v1338, %v1352
    %v1356 = vcombine.high %v1338, %v1352
    %v1357 = vcombine.low %v141, %v143
    %v1358 = vcombine.high %v141, %v143
    %v1359 = vcombine.low %v145, %v147
    %v1360 = vcombine.high %v145, %v147
    %v1362 = vunpack.c.l.s4 1983009808
    %v1363 = vunpack.c.0.s8 %v1362
    %v1364 = vlaneseq
    %v1365 = vshrl.u32 %v1364, 7
    %v1366 = vsub.s32 %v1363, %v1365
    %v1367 = vrot.slane %v1357, %v1366
    %v1369 = vunpack.c.l.s4 1983009808
    %v1370 = vunpack.c.0.s8 %v1369
    %v1371 = vlaneseq
    %v1372 = vshrl.u32 %v1371, 7
    %v1373 = vsub.s32 %v1370, %v1372
    %v1374 = vrot.slane %v1358, %v1373
    %v1376 = vunpack.c.l.s4 1983009808
    %v1377 = vunpack.c.0.s8 %v1376
    %v1378 = vlaneseq
    %v1379 = vshrl.u32 %v1378, 7
    %v1380 = vsub.s32 %v1377, %v1379
    %v1381 = vrot.slane %v1359, %v1380
    %v1383 = vunpack.c.l.s4 1983009808
    %v1384 = vunpack.c.0.s8 %v1383
    %v1385 = vlaneseq
    %v1386 = vshrl.u32 %v1385, 7
    %v1387 = vsub.s32 %v1384, %v1386
    %v1388 = vrot.slane %v1360, %v1387
    %v1389 = vcombine.low %v1367, %v1381
    %v1390 = vcombine.high %v1367, %v1381
    %v1391 = vcombine.low %v1374, %v1388
    %v1392 = vcombine.high %v1374, %v1388
    %v1393 = vcombine.low %v142, %v144
    %v1394 = vcombine.high %v142, %v144
    %v1395 = vcombine.low %v146, %v148
    %v1396 = vcombine.high %v146, %v148
    %v1398 = vunpack.c.l.s4 1983009808
    %v1399 = vunpack.c.0.s8 %v1398
    %v1400 = vlaneseq
    %v1401 = vshrl.u32 %v1400, 7
    %v1402 = vsub.s32 %v1399, %v1401
    %v1403 = vrot.slane %v1393, %v1402
    %v1405 = vunpack.c.l.s4 1983009808
    %v1406 = vunpack.c.0.s8 %v1405
    %v1407 = vlaneseq
    %v1408 = vshrl.u32 %v1407, 7
    %v1409 = vsub.s32 %v1406, %v1408
    %v1410 = vrot.slane %v1394, %v1409
    %v1412 = vunpack.c.l.s4 1983009808
    %v1413 = vunpack.c.0.s8 %v1412
    %v1414 = vlaneseq
    %v1415 = vshrl.u32 %v1414, 7
    %v1416 = vsub.s32 %v1413, %v1415
    %v1417 = vrot.slane %v1395, %v1416
    %v1419 = vunpack.c.l.s4 1983009808
    %v1420 = vunpack.c.0.s8 %v1419
    %v1421 = vlaneseq
    %v1422 = vshrl.u32 %v1421, 7
    %v1423 = vsub.s32 %v1420, %v1422
    %v1424 = vrot.slane %v1396, %v1423
    %v1425 = vcombine.low %v1403, %v1417
    %v1426 = vcombine.high %v1403, %v1417
    %v1427 = vcombine.low %v1410, %v1424
    %v1428 = vcombine.high %v1410, %v1424
    %v1557 = vpack.c.bf16 %v381, %v309
    %v1558 = vpack.c.bf16 %v382, %v310
    %v1559 = vpack.c.bf16 %v383, %v311
    %v1560 = vpack.c.bf16 %v384, %v312
    %v1561 = vpack.c.bf16 %v417, %v345
    %v1562 = vpack.c.bf16 %v418, %v346
    %v1563 = vpack.c.bf16 %v419, %v347
    %v1564 = vpack.c.bf16 %v420, %v348
    %v1565 = vpack.c.bf16 %v525, %v453
    %v1566 = vpack.c.bf16 %v526, %v454
    %v1567 = vpack.c.bf16 %v527, %v455
    %v1568 = vpack.c.bf16 %v528, %v456
    %v1569 = vpack.c.bf16 %v561, %v489
    %v1570 = vpack.c.bf16 %v562, %v490
    %v1571 = vpack.c.bf16 %v563, %v491
    %v1572 = vpack.c.bf16 %v564, %v492
    %v1573 = vpack.c.bf16 %v669, %v597
    %v1574 = vpack.c.bf16 %v670, %v598
    %v1575 = vpack.c.bf16 %v671, %v599
    %v1576 = vpack.c.bf16 %v672, %v600
    %v1577 = vpack.c.bf16 %v705, %v633
    %v1578 = vpack.c.bf16 %v706, %v634
    %v1579 = vpack.c.bf16 %v707, %v635
    %v1580 = vpack.c.bf16 %v708, %v636
    %v1581 = vpack.c.bf16 %v813, %v741
    %v1582 = vpack.c.bf16 %v814, %v742
    %v1583 = vpack.c.bf16 %v815, %v743
    %v1584 = vpack.c.bf16 %v816, %v744
    %v1585 = vpack.c.bf16 %v849, %v777
    %v1586 = vpack.c.bf16 %v850, %v778
    %v1587 = vpack.c.bf16 %v851, %v779
    %v1588 = vpack.c.bf16 %v852, %v780
    %v1589 = vpack.c.bf16 %v957, %v885
    %v1590 = vpack.c.bf16 %v958, %v886
    %v1591 = vpack.c.bf16 %v959, %v887
    %v1592 = vpack.c.bf16 %v960, %v888
    %v1593 = vpack.c.bf16 %v993, %v921
    %v1594 = vpack.c.bf16 %v994, %v922
    %v1595 = vpack.c.bf16 %v995, %v923
    %v1596 = vpack.c.bf16 %v996, %v924
    %v1597 = vpack.c.bf16 %v1101, %v1029
    %v1598 = vpack.c.bf16 %v1102, %v1030
    %v1599 = vpack.c.bf16 %v1103, %v1031
    %v1600 = vpack.c.bf16 %v1104, %v1032
    %v1601 = vpack.c.bf16 %v1137, %v1065
    %v1602 = vpack.c.bf16 %v1138, %v1066
    %v1603 = vpack.c.bf16 %v1139, %v1067
    %v1604 = vpack.c.bf16 %v1140, %v1068
    %v1605 = vpack.c.bf16 %v1245, %v1173
    %v1606 = vpack.c.bf16 %v1246, %v1174
    %v1607 = vpack.c.bf16 %v1247, %v1175
    %v1608 = vpack.c.bf16 %v1248, %v1176
    %v1609 = vpack.c.bf16 %v1281, %v1209
    %v1610 = vpack.c.bf16 %v1282, %v1210
    %v1611 = vpack.c.bf16 %v1283, %v1211
    %v1612 = vpack.c.bf16 %v1284, %v1212
    %v1613 = vpack.c.bf16 %v1389, %v1317
    %v1614 = vpack.c.bf16 %v1390, %v1318
    %v1615 = vpack.c.bf16 %v1391, %v1319
    %v1616 = vpack.c.bf16 %v1392, %v1320
    %v1617 = vpack.c.bf16 %v1425, %v1353
    %v1618 = vpack.c.bf16 %v1426, %v1354
    %v1619 = vpack.c.bf16 %v1427, %v1355
    %v1620 = vpack.c.bf16 %v1428, %v1356
    %v1621 = vld [vmem:[%s1] sm:$0xf]
    %v1622 = vld [vmem:[%s1 + $0x4] sm:$0xf]
    %v1623 = vld [vmem:[%s1 + $0x8] sm:$0xf]
    %v1624 = vld [vmem:[%s1 + $0xc] sm:$0xf]
    %v1625 = vld [vmem:[%s1 + $0x10] sm:$0xf]
    %v1626 = vld [vmem:[%s1 + $0x14] sm:$0xf]
    %v1627 = vld [vmem:[%s1 + $0x18] sm:$0xf]
    %v1628 = vld [vmem:[%s1 + $0x1c] sm:$0xf]
    %v1629 = vld [vmem:[%s1 + $0x20] sm:$0xf]
    %v1630 = vld [vmem:[%s1 + $0x24] sm:$0xf]
    %v1631 = vld [vmem:[%s1 + $0x28] sm:$0xf]
    %v1632 = vld [vmem:[%s1 + $0x2c] sm:$0xf]
    %v1633 = vld [vmem:[%s1 + $0x30] sm:$0xf]
    %v1634 = vld [vmem:[%s1 + $0x34] sm:$0xf]
    %v1635 = vld [vmem:[%s1 + $0x38] sm:$0xf]
    %v1636 = vld [vmem:[%s1 + $0x3c] sm:$0xf]
    %v1637 = vld [vmem:[%s1 + $0x40] sm:$0xf]
    %v1638 = vld [vmem:[%s1 + $0x44] sm:$0xf]
    %v1639 = vld [vmem:[%s1 + $0x48] sm:$0xf]
    %v1640 = vld [vmem:[%s1 + $0x4c] sm:$0xf]
    %v1641 = vld [vmem:[%s1 + $0x50] sm:$0xf]
    %v1642 = vld [vmem:[%s1 + $0x54] sm:$0xf]
    %v1643 = vld [vmem:[%s1 + $0x58] sm:$0xf]
    %v1644 = vld [vmem:[%s1 + $0x5c] sm:$0xf]
    %v1645 = vld [vmem:[%s1 + $0x60] sm:$0xf]
    %v1646 = vld [vmem:[%s1 + $0x64] sm:$0xf]
    %v1647 = vld [vmem:[%s1 + $0x68] sm:$0xf]
    %v1648 = vld [vmem:[%s1 + $0x6c] sm:$0xf]
    %v1649 = vld [vmem:[%s1 + $0x70] sm:$0xf]
    %v1650 = vld [vmem:[%s1 + $0x74] sm:$0xf]
    %v1651 = vld [vmem:[%s1 + $0x78] sm:$0xf]
    %v1652 = vld [vmem:[%s1 + $0x7c] sm:$0xf]
    %v1653 = vld [vmem:[%s1 + $0x80] sm:$0xf]
    %v1654 = vld [vmem:[%s1 + $0x84] sm:$0xf]
    %v1655 = vld [vmem:[%s1 + $0x88] sm:$0xf]
    %v1656 = vld [vmem:[%s1 + $0x8c] sm:$0xf]
    %v1657 = vld [vmem:[%s1 + $0x90] sm:$0xf]
    %v1658 = vld [vmem:[%s1 + $0x94] sm:$0xf]
    %v1659 = vld [vmem:[%s1 + $0x98] sm:$0xf]
    %v1660 = vld [vmem:[%s1 + $0x9c] sm:$0xf]
    %v1661 = vld [vmem:[%s1 + $0xa0] sm:$0xf]
    %v1662 = vld [vmem:[%s1 + $0xa4] sm:$0xf]
    %v1663 = vld [vmem:[%s1 + $0xa8] sm:$0xf]
    %v1664 = vld [vmem:[%s1 + $0xac] sm:$0xf]
    %v1665 = vld [vmem:[%s1 + $0xb0] sm:$0xf]
    %v1666 = vld [vmem:[%s1 + $0xb4] sm:$0xf]
    %v1667 = vld [vmem:[%s1 + $0xb8] sm:$0xf]
    %v1668 = vld [vmem:[%s1 + $0xbc] sm:$0xf]
    %v1669 = vld [vmem:[%s1 + $0xc0] sm:$0xf]
    %v1670 = vld [vmem:[%s1 + $0xc4] sm:$0xf]
    %v1671 = vld [vmem:[%s1 + $0xc8] sm:$0xf]
    %v1672 = vld [vmem:[%s1 + $0xcc] sm:$0xf]
    %v1673 = vld [vmem:[%s1 + $0xd0] sm:$0xf]
    %v1674 = vld [vmem:[%s1 + $0xd4] sm:$0xf]
    %v1675 = vld [vmem:[%s1 + $0xd8] sm:$0xf]
    %v1676 = vld [vmem:[%s1 + $0xdc] sm:$0xf]
    %v1677 = vld [vmem:[%s1 + $0xe0] sm:$0xf]
    %v1678 = vld [vmem:[%s1 + $0xe4] sm:$0xf]
    %v1679 = vld [vmem:[%s1 + $0xe8] sm:$0xf]
    %v1680 = vld [vmem:[%s1 + $0xec] sm:$0xf]
    %v1681 = vld [vmem:[%s1 + $0xf0] sm:$0xf]
    %v1682 = vld [vmem:[%s1 + $0xf4] sm:$0xf]
    %v1683 = vld [vmem:[%s1 + $0xf8] sm:$0xf]
    %v1684 = vld [vmem:[%s1 + $0xfc] sm:$0xf]
    %v1685 = vld [vmem:[%s1 + $0x100] sm:$0xf]
    %v1686 = vld [vmem:[%s1 + $0x104] sm:$0xf]
    %v1687 = vld [vmem:[%s1 + $0x108] sm:$0xf]
    %v1688 = vld [vmem:[%s1 + $0x10c] sm:$0xf]
    %v1689 = vld [vmem:[%s1 + $0x110] sm:$0xf]
    %v1690 = vld [vmem:[%s1 + $0x114] sm:$0xf]
    %v1691 = vld [vmem:[%s1 + $0x118] sm:$0xf]
    %v1692 = vld [vmem:[%s1 + $0x11c] sm:$0xf]
    %v1693 = vld [vmem:[%s1 + $0x120] sm:$0xf]
    %v1694 = vld [vmem:[%s1 + $0x124] sm:$0xf]
    %v1695 = vld [vmem:[%s1 + $0x128] sm:$0xf]
    %v1696 = vld [vmem:[%s1 + $0x12c] sm:$0xf]
    %v1697 = vld [vmem:[%s1 + $0x130] sm:$0xf]
    %v1698 = vld [vmem:[%s1 + $0x134] sm:$0xf]
    %v1699 = vld [vmem:[%s1 + $0x138] sm:$0xf]
    %v1700 = vld [vmem:[%s1 + $0x13c] sm:$0xf]
    %v1701 = vld [vmem:[%s1 + $0x140] sm:$0xf]
    %v1702 = vld [vmem:[%s1 + $0x144] sm:$0xf]
    %v1703 = vld [vmem:[%s1 + $0x148] sm:$0xf]
    %v1704 = vld [vmem:[%s1 + $0x14c] sm:$0xf]
    %v1705 = vld [vmem:[%s1 + $0x150] sm:$0xf]
    %v1706 = vld [vmem:[%s1 + $0x154] sm:$0xf]
    %v1707 = vld [vmem:[%s1 + $0x158] sm:$0xf]
    %v1708 = vld [vmem:[%s1 + $0x15c] sm:$0xf]
    %v1709 = vld [vmem:[%s1 + $0x160] sm:$0xf]
    %v1710 = vld [vmem:[%s1 + $0x164] sm:$0xf]
    %v1711 = vld [vmem:[%s1 + $0x168] sm:$0xf]
    %v1712 = vld [vmem:[%s1 + $0x16c] sm:$0xf]
    %v1713 = vld [vmem:[%s1 + $0x170] sm:$0xf]
    %v1714 = vld [vmem:[%s1 + $0x174] sm:$0xf]
    %v1715 = vld [vmem:[%s1 + $0x178] sm:$0xf]
    %v1716 = vld [vmem:[%s1 + $0x17c] sm:$0xf]
    %v1717 = vld [vmem:[%s1 + $0x180] sm:$0xf]
    %v1718 = vld [vmem:[%s1 + $0x184] sm:$0xf]
    %v1719 = vld [vmem:[%s1 + $0x188] sm:$0xf]
    %v1720 = vld [vmem:[%s1 + $0x18c] sm:$0xf]
    %v1721 = vld [vmem:[%s1 + $0x190] sm:$0xf]
    %v1722 = vld [vmem:[%s1 + $0x194] sm:$0xf]
    %v1723 = vld [vmem:[%s1 + $0x198] sm:$0xf]
    %v1724 = vld [vmem:[%s1 + $0x19c] sm:$0xf]
    %v1725 = vld [vmem:[%s1 + $0x1a0] sm:$0xf]
    %v1726 = vld [vmem:[%s1 + $0x1a4] sm:$0xf]
    %v1727 = vld [vmem:[%s1 + $0x1a8] sm:$0xf]
    %v1728 = vld [vmem:[%s1 + $0x1ac] sm:$0xf]
    %v1729 = vld [vmem:[%s1 + $0x1b0] sm:$0xf]
    %v1730 = vld [vmem:[%s1 + $0x1b4] sm:$0xf]
    %v1731 = vld [vmem:[%s1 + $0x1b8] sm:$0xf]
    %v1732 = vld [vmem:[%s1 + $0x1bc] sm:$0xf]
    %v1733 = vld [vmem:[%s1 + $0x1c0] sm:$0xf]
    %v1734 = vld [vmem:[%s1 + $0x1c4] sm:$0xf]
    %v1735 = vld [vmem:[%s1 + $0x1c8] sm:$0xf]
    %v1736 = vld [vmem:[%s1 + $0x1cc] sm:$0xf]
    %v1737 = vld [vmem:[%s1 + $0x1d0] sm:$0xf]
    %v1738 = vld [vmem:[%s1 + $0x1d4] sm:$0xf]
    %v1739 = vld [vmem:[%s1 + $0x1d8] sm:$0xf]
    %v1740 = vld [vmem:[%s1 + $0x1dc] sm:$0xf]
    %v1741 = vld [vmem:[%s1 + $0x1e0] sm:$0xf]
    %v1742 = vld [vmem:[%s1 + $0x1e4] sm:$0xf]
    %v1743 = vld [vmem:[%s1 + $0x1e8] sm:$0xf]
    %v1744 = vld [vmem:[%s1 + $0x1ec] sm:$0xf]
    %v1745 = vld [vmem:[%s1 + $0x1f0] sm:$0xf]
    %v1746 = vld [vmem:[%s1 + $0x1f4] sm:$0xf]
    %v1747 = vld [vmem:[%s1 + $0x1f8] sm:$0xf]
    %v1748 = vld [vmem:[%s1 + $0x1fc] sm:$0xf]
    %v1749 = vld [vmem:[%s2] sm:$0x1]
    %v1751 = vlaneseq
    %v1752 = vshrl.u32 %v1751, 7
    %v1753 = vsub.s32 0, %v1752
    %v1754 = vrot.slane %v1749, %v1753
    %v1884 = vunpack.c.l.b16 %v1621
    %v1885 = vunpack.c.l.b16 %v1622
    %v1886 = vunpack.c.l.b16 %v1623
    %v1887 = vunpack.c.l.b16 %v1624
    %v1888 = vunpack.c.l.b16 %v1625
    %v1889 = vunpack.c.l.b16 %v1626
    %v1890 = vunpack.c.l.b16 %v1627
    %v1891 = vunpack.c.l.b16 %v1628
    %v1892 = vunpack.c.l.b16 %v1629
    %v1893 = vunpack.c.l.b16 %v1630
    %v1894 = vunpack.c.l.b16 %v1631
    %v1895 = vunpack.c.l.b16 %v1632
    %v1896 = vunpack.c.l.b16 %v1633
    %v1897 = vunpack.c.l.b16 %v1634
    %v1898 = vunpack.c.l.b16 %v1635
    %v1899 = vunpack.c.l.b16 %v1636
    %v1900 = vunpack.c.l.b16 %v1637
    %v1901 = vunpack.c.l.b16 %v1638
    %v1902 = vunpack.c.l.b16 %v1639
    %v1903 = vunpack.c.l.b16 %v1640
    %v1904 = vunpack.c.l.b16 %v1641
    %v1905 = vunpack.c.l.b16 %v1642
    %v1906 = vunpack.c.l.b16 %v1643
    %v1907 = vunpack.c.l.b16 %v1644
    %v1908 = vunpack.c.l.b16 %v1645
    %v1909 = vunpack.c.l.b16 %v1646
    %v1910 = vunpack.c.l.b16 %v1647
    %v1911 = vunpack.c.l.b16 %v1648
    %v1912 = vunpack.c.l.b16 %v1649
    %v1913 = vunpack.c.l.b16 %v1650
    %v1914 = vunpack.c.l.b16 %v1651
    %v1915 = vunpack.c.l.b16 %v1652
    %v1916 = vunpack.c.l.b16 %v1653
    %v1917 = vunpack.c.l.b16 %v1654
    %v1918 = vunpack.c.l.b16 %v1655
    %v1919 = vunpack.c.l.b16 %v1656
    %v1920 = vunpack.c.l.b16 %v1657
    %v1921 = vunpack.c.l.b16 %v1658
    %v1922 = vunpack.c.l.b16 %v1659
    %v1923 = vunpack.c.l.b16 %v1660
    %v1924 = vunpack.c.l.b16 %v1661
    %v1925 = vunpack.c.l.b16 %v1662
    %v1926 = vunpack.c.l.b16 %v1663
    %v1927 = vunpack.c.l.b16 %v1664
    %v1928 = vunpack.c.l.b16 %v1665
    %v1929 = vunpack.c.l.b16 %v1666
    %v1930 = vunpack.c.l.b16 %v1667
    %v1931 = vunpack.c.l.b16 %v1668
    %v1932 = vunpack.c.l.b16 %v1669
    %v1933 = vunpack.c.l.b16 %v1670
    %v1934 = vunpack.c.l.b16 %v1671
    %v1935 = vunpack.c.l.b16 %v1672
    %v1936 = vunpack.c.l.b16 %v1673
    %v1937 = vunpack.c.l.b16 %v1674
    %v1938 = vunpack.c.l.b16 %v1675
    %v1939 = vunpack.c.l.b16 %v1676
    %v1940 = vunpack.c.l.b16 %v1677
    %v1941 = vunpack.c.l.b16 %v1678
    %v1942 = vunpack.c.l.b16 %v1679
    %v1943 = vunpack.c.l.b16 %v1680
    %v1944 = vunpack.c.l.b16 %v1681
    %v1945 = vunpack.c.l.b16 %v1682
    %v1946 = vunpack.c.l.b16 %v1683
    %v1947 = vunpack.c.l.b16 %v1684
    %v1948 = vunpack.c.l.b16 %v1685
    %v1949 = vunpack.c.l.b16 %v1686
    %v1950 = vunpack.c.l.b16 %v1687
    %v1951 = vunpack.c.l.b16 %v1688
    %v1952 = vunpack.c.l.b16 %v1689
    %v1953 = vunpack.c.l.b16 %v1690
    %v1954 = vunpack.c.l.b16 %v1691
    %v1955 = vunpack.c.l.b16 %v1692
    %v1956 = vunpack.c.l.b16 %v1693
    %v1957 = vunpack.c.l.b16 %v1694
    %v1958 = vunpack.c.l.b16 %v1695
    %v1959 = vunpack.c.l.b16 %v1696
    %v1960 = vunpack.c.l.b16 %v1697
    %v1961 = vunpack.c.l.b16 %v1698
    %v1962 = vunpack.c.l.b16 %v1699
    %v1963 = vunpack.c.l.b16 %v1700
    %v1964 = vunpack.c.l.b16 %v1701
    %v1965 = vunpack.c.l.b16 %v1702
    %v1966 = vunpack.c.l.b16 %v1703
    %v1967 = vunpack.c.l.b16 %v1704
    %v1968 = vunpack.c.l.b16 %v1705
    %v1969 = vunpack.c.l.b16 %v1706
    %v1970 = vunpack.c.l.b16 %v1707
    %v1971 = vunpack.c.l.b16 %v1708
    %v1972 = vunpack.c.l.b16 %v1709
    %v1973 = vunpack.c.l.b16 %v1710
    %v1974 = vunpack.c.l.b16 %v1711
    %v1975 = vunpack.c.l.b16 %v1712
    %v1976 = vunpack.c.l.b16 %v1713
    %v1977 = vunpack.c.l.b16 %v1714
    %v1978 = vunpack.c.l.b16 %v1715
    %v1979 = vunpack.c.l.b16 %v1716
    %v1980 = vunpack.c.l.b16 %v1717
    %v1981 = vunpack.c.l.b16 %v1718
    %v1982 = vunpack.c.l.b16 %v1719
    %v1983 = vunpack.c.l.b16 %v1720
    %v1984 = vunpack.c.l.b16 %v1721
    %v1985 = vunpack.c.l.b16 %v1722
    %v1986 = vunpack.c.l.b16 %v1723
    %v1987 = vunpack.c.l.b16 %v1724
    %v1988 = vunpack.c.l.b16 %v1725
    %v1989 = vunpack.c.l.b16 %v1726
    %v1990 = vunpack.c.l.b16 %v1727
    %v1991 = vunpack.c.l.b16 %v1728
    %v1992 = vunpack.c.l.b16 %v1729
    %v1993 = vunpack.c.l.b16 %v1730
    %v1994 = vunpack.c.l.b16 %v1731
    %v1995 = vunpack.c.l.b16 %v1732
    %v1996 = vunpack.c.l.b16 %v1733
    %v1997 = vunpack.c.l.b16 %v1734
    %v1998 = vunpack.c.l.b16 %v1735
    %v1999 = vunpack.c.l.b16 %v1736
    %v2000 = vunpack.c.l.b16 %v1737
    %v2001 = vunpack.c.l.b16 %v1738
    %v2002 = vunpack.c.l.b16 %v1739
    %v2003 = vunpack.c.l.b16 %v1740
    %v2004 = vunpack.c.l.b16 %v1741
    %v2005 = vunpack.c.l.b16 %v1742
    %v2006 = vunpack.c.l.b16 %v1743
    %v2007 = vunpack.c.l.b16 %v1744
    %v2008 = vunpack.c.l.b16 %v1745
    %v2009 = vunpack.c.l.b16 %v1746
    %v2010 = vunpack.c.l.b16 %v1747
    %v2011 = vunpack.c.l.b16 %v1748
    %v2012 = vpack.c.b16 %v1885, %v1884
    %v2013 = vpack.c.b16 %v1887, %v1886
    %v2014 = vpack.c.b16 %v1889, %v1888
    %v2015 = vpack.c.b16 %v1891, %v1890
    %v2016 = vpack.c.b16 %v1893, %v1892
    %v2017 = vpack.c.b16 %v1895, %v1894
    %v2018 = vpack.c.b16 %v1897, %v1896
    %v2019 = vpack.c.b16 %v1899, %v1898
    %v2020 = vpack.c.b16 %v1901, %v1900
    %v2021 = vpack.c.b16 %v1903, %v1902
    %v2022 = vpack.c.b16 %v1905, %v1904
    %v2023 = vpack.c.b16 %v1907, %v1906
    %v2024 = vpack.c.b16 %v1909, %v1908
    %v2025 = vpack.c.b16 %v1911, %v1910
    %v2026 = vpack.c.b16 %v1913, %v1912
    %v2027 = vpack.c.b16 %v1915, %v1914
    %v2028 = vpack.c.b16 %v1917, %v1916
    %v2029 = vpack.c.b16 %v1919, %v1918
    %v2030 = vpack.c.b16 %v1921, %v1920
    %v2031 = vpack.c.b16 %v1923, %v1922
    %v2032 = vpack.c.b16 %v1925, %v1924
    %v2033 = vpack.c.b16 %v1927, %v1926
    %v2034 = vpack.c.b16 %v1929, %v1928
    %v2035 = vpack.c.b16 %v1931, %v1930
    %v2036 = vpack.c.b16 %v1933, %v1932
    %v2037 = vpack.c.b16 %v1935, %v1934
    %v2038 = vpack.c.b16 %v1937, %v1936
    %v2039 = vpack.c.b16 %v1939, %v1938
    %v2040 = vpack.c.b16 %v1941, %v1940
    %v2041 = vpack.c.b16 %v1943, %v1942
    %v2042 = vpack.c.b16 %v1945, %v1944
    %v2043 = vpack.c.b16 %v1947, %v1946
    %v2044 = vpack.c.b16 %v1949, %v1948
    %v2045 = vpack.c.b16 %v1951, %v1950
    %v2046 = vpack.c.b16 %v1953, %v1952
    %v2047 = vpack.c.b16 %v1955, %v1954
    %v2048 = vpack.c.b16 %v1957, %v1956
    %v2049 = vpack.c.b16 %v1959, %v1958
    %v2050 = vpack.c.b16 %v1961, %v1960
    %v2051 = vpack.c.b16 %v1963, %v1962
    %v2052 = vpack.c.b16 %v1965, %v1964
    %v2053 = vpack.c.b16 %v1967, %v1966
    %v2054 = vpack.c.b16 %v1969, %v1968
    %v2055 = vpack.c.b16 %v1971, %v1970
    %v2056 = vpack.c.b16 %v1973, %v1972
    %v2057 = vpack.c.b16 %v1975, %v1974
    %v2058 = vpack.c.b16 %v1977, %v1976
    %v2059 = vpack.c.b16 %v1979, %v1978
    %v2060 = vpack.c.b16 %v1981, %v1980
    %v2061 = vpack.c.b16 %v1983, %v1982
    %v2062 = vpack.c.b16 %v1985, %v1984
    %v2063 = vpack.c.b16 %v1987, %v1986
    %v2064 = vpack.c.b16 %v1989, %v1988
    %v2065 = vpack.c.b16 %v1991, %v1990
    %v2066 = vpack.c.b16 %v1993, %v1992
    %v2067 = vpack.c.b16 %v1995, %v1994
    %v2068 = vpack.c.b16 %v1997, %v1996
    %v2069 = vpack.c.b16 %v1999, %v1998
    %v2070 = vpack.c.b16 %v2001, %v2000
    %v2071 = vpack.c.b16 %v2003, %v2002
    %v2072 = vpack.c.b16 %v2005, %v2004
    %v2073 = vpack.c.b16 %v2007, %v2006
    %v2074 = vpack.c.b16 %v2009, %v2008
    %v2075 = vpack.c.b16 %v2011, %v2010
    %2140 = vmatprep.subr.bf16.mxu0 0
    %2141 = vmatpush1.bf16.msra.mxu0 %v2012
    %2142 = vmatprep.subr.bf16.mxu0 0
    %2143 = vmatpush1.bf16.msra.mxu0 %v2013
    %2144 = vmatprep.subr.bf16.mxu0 0
    %2145 = vmatpush1.bf16.msra.mxu0 %v2014
    %2146 = vmatprep.subr.bf16.mxu0 0
    %2147 = vmatpush1.bf16.msra.mxu0 %v2015
    %2148 = vmatprep.subr.bf16.mxu0 0
    %2149 = vmatpush1.bf16.msra.mxu0 %v2016
    %2150 = vmatprep.subr.bf16.mxu0 0
    %2151 = vmatpush1.bf16.msra.mxu0 %v2017
    %2152 = vmatprep.subr.bf16.mxu0 0
    %2153 = vmatpush1.bf16.msra.mxu0 %v2018
    %2154 = vmatprep.subr.bf16.mxu0 0
    %2155 = vmatpush1.bf16.msra.mxu0 %v2019
    %2156 = vmatprep.subr.bf16.mxu0 0
    %2157 = vmatpush1.bf16.msra.mxu0 %v2020
    %2158 = vmatprep.subr.bf16.mxu0 0
    %2159 = vmatpush1.bf16.msra.mxu0 %v2021
    %2160 = vmatprep.subr.bf16.mxu0 0
    %2161 = vmatpush1.bf16.msra.mxu0 %v2022
    %2162 = vmatprep.subr.bf16.mxu0 0
    %2163 = vmatpush1.bf16.msra.mxu0 %v2023
    %2164 = vmatprep.subr.bf16.mxu0 0
    %2165 = vmatpush1.bf16.msra.mxu0 %v2024
    %2166 = vmatprep.subr.bf16.mxu0 0
    %2167 = vmatpush1.bf16.msra.mxu0 %v2025
    %2168 = vmatprep.subr.bf16.mxu0 0
    %2169 = vmatpush1.bf16.msra.mxu0 %v2026
    %2170 = vmatprep.subr.bf16.mxu0 0
    %2171 = vmatpush1.bf16.msra.mxu0 %v2027
    %2172 = vmatprep.mubr.bf16.mxu0 %v1558
    %2173 = vmatmul.mubr.bf16.gmra.mrb[0].mxu0 %v1557
    %v2174 = vpop.f32.mrb[0].mxu0
    %v2175 = vadd.f32 %v1754, %v2174
    %v2176 = vpop.f32.mrb[0].mxu0
    %v2177 = vpop.f32.mrb[0].mxu0
    %v2178 = vadd.f32 %v1754, %v2177
    %v2179 = vpop.f32.mrb[0].mxu0
    %2180 = vmatprep.mubr.bf16.mxu0 %v1566
    %2181 = vmatmul.mubr.bf16.gmra.mrb[0].mxu0 %v1565
    %v2182 = vpop.f32.mrb[0].mxu0
    %v2183 = vadd.f32 %v1754, %v2182
    %v2184 = vpop.f32.mrb[0].mxu0
    %v2185 = vpop.f32.mrb[0].mxu0
    %v2186 = vadd.f32 %v1754, %v2185
    %v2187 = vpop.f32.mrb[0].mxu0
    %2188 = vmatprep.mubr.bf16.mxu0 %v1574
    %2189 = vmatmul.mubr.bf16.gmra.mrb[0].mxu0 %v1573
    %v2190 = vpop.f32.mrb[0].mxu0
    %v2191 = vadd.f32 %v1754, %v2190
    %v2192 = vpop.f32.mrb[0].mxu0
    %v2193 = vpop.f32.mrb[0].mxu0
    %v2194 = vadd.f32 %v1754, %v2193
    %v2195 = vpop.f32.mrb[0].mxu0
    %2196 = vmatprep.mubr.bf16.mxu0 %v1582
    %2197 = vmatmul.mubr.bf16.gmra.mrb[0].mxu0 %v1581
    %v2198 = vpop.f32.mrb[0].mxu0
    %v2199 = vadd.f32 %v1754, %v2198
    %v2200 = vpop.f32.mrb[0].mxu0
    %v2201 = vpop.f32.mrb[0].mxu0
    %v2202 = vadd.f32 %v1754, %v2201
    %v2203 = vpop.f32.mrb[0].mxu0
    %2204 = vmatprep.mubr.bf16.mxu0 %v1590
    %2205 = vmatmul.mubr.bf16.gmra.mrb[0].mxu0 %v1589
    %v2206 = vpop.f32.mrb[0].mxu0
    %v2207 = vadd.f32 %v1754, %v2206
    %v2208 = vpop.f32.mrb[0].mxu0
    %v2209 = vpop.f32.mrb[0].mxu0
    %v2210 = vadd.f32 %v1754, %v2209
    %v2211 = vpop.f32.mrb[0].mxu0
    %2212 = vmatprep.mubr.bf16.mxu0 %v1598
    %2213 = vmatmul.mubr.bf16.gmra.mrb[0].mxu0 %v1597
    %v2214 = vpop.f32.mrb[0].mxu0
    %v2215 = vadd.f32 %v1754, %v2214
    %v2216 = vpop.f32.mrb[0].mxu0
    %v2217 = vpop.f32.mrb[0].mxu0
    %v2218 = vadd.f32 %v1754, %v2217
    %v2219 = vpop.f32.mrb[0].mxu0
    %2220 = vmatprep.mubr.bf16.mxu0 %v1606
    %2221 = vmatmul.mubr.bf16.gmra.mrb[0].mxu0 %v1605
    %v2222 = vpop.f32.mrb[0].mxu0
    %v2223 = vadd.f32 %v1754, %v2222
    %v2224 = vpop.f32.mrb[0].mxu0
    %v2225 = vpop.f32.mrb[0].mxu0
    %v2226 = vadd.f32 %v1754, %v2225
    %v2227 = vpop.f32.mrb[0].mxu0
    %2228 = vmatprep.mubr.bf16.mxu0 %v1614
    %2229 = vmatmul.mubr.bf16.gmra.mrb[0].mxu0 %v1613
    %v2230 = vpop.f32.mrb[0].mxu0
    %v2231 = vadd.f32 %v1754, %v2230
    %v2232 = vpop.f32.mrb[0].mxu0
    %v2233 = vpop.f32.mrb[0].mxu0
    %v2234 = vadd.f32 %v1754, %v2233
    %v2235 = vpop.f32.mrb[0].mxu0
    %2236 = vdwg.mxu0
    %2237 = vmatprep.subr.bf16.mxu0 0
    %2238 = vmatpush1.bf16.msra.mxu0 %v2028
    %2239 = vmatprep.subr.bf16.mxu0 0
    %2240 = vmatpush1.bf16.msra.mxu0 %v2029
    %2241 = vmatprep.subr.bf16.mxu0 0
    %2242 = vmatpush1.bf16.msra.mxu0 %v2030
    %2243 = vmatprep.subr.bf16.mxu0 0
    %2244 = vmatpush1.bf16.msra.mxu0 %v2031
    %2245 = vmatprep.subr.bf16.mxu0 0
    %2246 = vmatpush1.bf16.msra.mxu0 %v2032
    %2247 = vmatprep.subr.bf16.mxu0 0
    %2248 = vmatpush1.bf16.msra.mxu0 %v2033
    %2249 = vmatprep.subr.bf16.mxu0 0
    %2250 = vmatpush1.bf16.msra.mxu0 %v2034
    %2251 = vmatprep.subr.bf16.mxu0 0
    %2252 = vmatpush1.bf16.msra.mxu0 %v2035
    %2253 = vmatprep.subr.bf16.mxu0 0
    %2254 = vmatpush1.bf16.msra.mxu0 %v2036
    %2255 = vmatprep.subr.bf16.mxu0 0
    %2256 = vmatpush1.bf16.msra.mxu0 %v2037
    %2257 = vmatprep.subr.bf16.mxu0 0
    %2258 = vmatpush1.bf16.msra.mxu0 %v2038
    %2259 = vmatprep.subr.bf16.mxu0 0
    %2260 = vmatpush1.bf16.msra.mxu0 %v2039
    %2261 = vmatprep.subr.bf16.mxu0 0
    %2262 = vmatpush1.bf16.msra.mxu0 %v2040
    %2263 = vmatprep.subr.bf16.mxu0 0
    %2264 = vmatpush1.bf16.msra.mxu0 %v2041
    %2265 = vmatprep.subr.bf16.mxu0 0
    %2266 = vmatpush1.bf16.msra.mxu0 %v2042
    %2267 = vmatprep.subr.bf16.mxu0 0
    %2268 = vmatpush1.bf16.msra.mxu0 %v2043
    %2269 = vmatprep.mubr.bf16.mxu0 %v1560
    %2270 = vmatmul.mubr.bf16.gmra.mrb[0].mxu0 %v1559
    %v2271 = vpop.f32.mrb[0].mxu0
    %v2272 = vadd.f32 %v2175, %v2271
    %v2273 = vpop.f32.mrb[0].mxu0
    %v2274 = vpop.f32.mrb[0].mxu0
    %v2275 = vadd.f32 %v2178, %v2274
    %v2276 = vpop.f32.mrb[0].mxu0
    %2277 = vmatprep.mubr.bf16.mxu0 %v1568
    %2278 = vmatmul.mubr.bf16.gmra.mrb[0].mxu0 %v1567
    %v2279 = vpop.f32.mrb[0].mxu0
    %v2280 = vadd.f32 %v2183, %v2279
    %v2281 = vpop.f32.mrb[0].mxu0
    %v2282 = vpop.f32.mrb[0].mxu0
    %v2283 = vadd.f32 %v2186, %v2282
    %v2284 = vpop.f32.mrb[0].mxu0
    %2285 = vmatprep.mubr.bf16.mxu0 %v1576
    %2286 = vmatmul.mubr.bf16.gmra.mrb[0].mxu0 %v1575
    %v2287 = vpop.f32.mrb[0].mxu0
    %v2288 = vadd.f32 %v2191, %v2287
    %v2289 = vpop.f32.mrb[0].mxu0
    %v2290 = vpop.f32.mrb[0].mxu0
    %v2291 = vadd.f32 %v2194, %v2290
    %v2292 = vpop.f32.mrb[0].mxu0
    %2293 = vmatprep.mubr.bf16.mxu0 %v1584
    %2294 = vmatmul.mubr.bf16.gmra.mrb[0].mxu0 %v1583
    %v2295 = vpop.f32.mrb[0].mxu0
    %v2296 = vadd.f32 %v2199, %v2295
    %v2297 = vpop.f32.mrb[0].mxu0
    %v2298 = vpop.f32.mrb[0].mxu0
    %v2299 = vadd.f32 %v2202, %v2298
    %v2300 = vpop.f32.mrb[0].mxu0
    %2301 = vmatprep.mubr.bf16.mxu0 %v1592
    %2302 = vmatmul.mubr.bf16.gmra.mrb[0].mxu0 %v1591
    %v2303 = vpop.f32.mrb[0].mxu0
    %v2304 = vadd.f32 %v2207, %v2303
    %v2305 = vpop.f32.mrb[0].mxu0
    %v2306 = vpop.f32.mrb[0].mxu0
    %v2307 = vadd.f32 %v2210, %v2306
    %v2308 = vpop.f32.mrb[0].mxu0
    %2309 = vmatprep.mubr.bf16.mxu0 %v1600
    %2310 = vmatmul.mubr.bf16.gmra.mrb[0].mxu0 %v1599
    %v2311 = vpop.f32.mrb[0].mxu0
    %v2312 = vadd.f32 %v2215, %v2311
    %v2313 = vpop.f32.mrb[0].mxu0
    %v2314 = vpop.f32.mrb[0].mxu0
    %v2315 = vadd.f32 %v2218, %v2314
    %v2316 = vpop.f32.mrb[0].mxu0
    %2317 = vmatprep.mubr.bf16.mxu0 %v1608
    %2318 = vmatmul.mubr.bf16.gmra.mrb[0].mxu0 %v1607
    %v2319 = vpop.f32.mrb[0].mxu0
    %v2320 = vadd.f32 %v2223, %v2319
    %v2321 = vpop.f32.mrb[0].mxu0
    %v2322 = vpop.f32.mrb[0].mxu0
    %v2323 = vadd.f32 %v2226, %v2322
    %v2324 = vpop.f32.mrb[0].mxu0
    %2325 = vmatprep.mubr.bf16.mxu0 %v1616
    %2326 = vmatmul.mubr.bf16.gmra.mrb[0].mxu0 %v1615
    %v2327 = vpop.f32.mrb[0].mxu0
    %v2328 = vadd.f32 %v2231, %v2327
    %v2329 = vpop.f32.mrb[0].mxu0
    %v2330 = vpop.f32.mrb[0].mxu0
    %v2331 = vadd.f32 %v2234, %v2330
    %v2332 = vpop.f32.mrb[0].mxu0
    %2333 = vdwg.mxu0
    %2334 = vmatprep.subr.bf16.mxu0 0
    %2335 = vmatpush1.bf16.msra.mxu0 %v2044
    %2336 = vmatprep.subr.bf16.mxu0 0
    %2337 = vmatpush1.bf16.msra.mxu0 %v2045
    %2338 = vmatprep.subr.bf16.mxu0 0
    %2339 = vmatpush1.bf16.msra.mxu0 %v2046
    %2340 = vmatprep.subr.bf16.mxu0 0
    %2341 = vmatpush1.bf16.msra.mxu0 %v2047
    %2342 = vmatprep.subr.bf16.mxu0 0
    %2343 = vmatpush1.bf16.msra.mxu0 %v2048
    %2344 = vmatprep.subr.bf16.mxu0 0
    %2345 = vmatpush1.bf16.msra.mxu0 %v2049
    %2346 = vmatprep.subr.bf16.mxu0 0
    %2347 = vmatpush1.bf16.msra.mxu0 %v2050
    %2348 = vmatprep.subr.bf16.mxu0 0
    %2349 = vmatpush1.bf16.msra.mxu0 %v2051
    %2350 = vmatprep.subr.bf16.mxu0 0
    %2351 = vmatpush1.bf16.msra.mxu0 %v2052
    %2352 = vmatprep.subr.bf16.mxu0 0
    %2353 = vmatpush1.bf16.msra.mxu0 %v2053
    %2354 = vmatprep.subr.bf16.mxu0 0
    %2355 = vmatpush1.bf16.msra.mxu0 %v2054
    %2356 = vmatprep.subr.bf16.mxu0 0
    %2357 = vmatpush1.bf16.msra.mxu0 %v2055
    %2358 = vmatprep.subr.bf16.mxu0 0
    %2359 = vmatpush1.bf16.msra.mxu0 %v2056
    %2360 = vmatprep.subr.bf16.mxu0 0
    %2361 = vmatpush1.bf16.msra.mxu0 %v2057
    %2362 = vmatprep.subr.bf16.mxu0 0
    %2363 = vmatpush1.bf16.msra.mxu0 %v2058
    %2364 = vmatprep.subr.bf16.mxu0 0
    %2365 = vmatpush1.bf16.msra.mxu0 %v2059
    %2366 = vmatprep.mubr.bf16.mxu0 %v1562
    %2367 = vmatmul.mubr.bf16.gmra.mrb[0].mxu0 %v1561
    %v2368 = vpop.f32.mrb[0].mxu0
    %v2369 = vadd.f32 %v2272, %v2368
    %v2370 = vpop.f32.mrb[0].mxu0
    %v2371 = vpop.f32.mrb[0].mxu0
    %v2372 = vadd.f32 %v2275, %v2371
    %v2373 = vpop.f32.mrb[0].mxu0
    %2374 = vmatprep.mubr.bf16.mxu0 %v1570
    %2375 = vmatmul.mubr.bf16.gmra.mrb[0].mxu0 %v1569
    %v2376 = vpop.f32.mrb[0].mxu0
    %v2377 = vadd.f32 %v2280, %v2376
    %v2378 = vpop.f32.mrb[0].mxu0
    %v2379 = vpop.f32.mrb[0].mxu0
    %v2380 = vadd.f32 %v2283, %v2379
    %v2381 = vpop.f32.mrb[0].mxu0
    %2382 = vmatprep.mubr.bf16.mxu0 %v1578
    %2383 = vmatmul.mubr.bf16.gmra.mrb[0].mxu0 %v1577
    %v2384 = vpop.f32.mrb[0].mxu0
    %v2385 = vadd.f32 %v2288, %v2384
    %v2386 = vpop.f32.mrb[0].mxu0
    %v2387 = vpop.f32.mrb[0].mxu0
    %v2388 = vadd.f32 %v2291, %v2387
    %v2389 = vpop.f32.mrb[0].mxu0
    %2390 = vmatprep.mubr.bf16.mxu0 %v1586
    %2391 = vmatmul.mubr.bf16.gmra.mrb[0].mxu0 %v1585
    %v2392 = vpop.f32.mrb[0].mxu0
    %v2393 = vadd.f32 %v2296, %v2392
    %v2394 = vpop.f32.mrb[0].mxu0
    %v2395 = vpop.f32.mrb[0].mxu0
    %v2396 = vadd.f32 %v2299, %v2395
    %v2397 = vpop.f32.mrb[0].mxu0
    %2398 = vmatprep.mubr.bf16.mxu0 %v1594
    %2399 = vmatmul.mubr.bf16.gmra.mrb[0].mxu0 %v1593
    %v2400 = vpop.f32.mrb[0].mxu0
    %v2401 = vadd.f32 %v2304, %v2400
    %v2402 = vpop.f32.mrb[0].mxu0
    %v2403 = vpop.f32.mrb[0].mxu0
    %v2404 = vadd.f32 %v2307, %v2403
    %v2405 = vpop.f32.mrb[0].mxu0
    %2406 = vmatprep.mubr.bf16.mxu0 %v1602
    %2407 = vmatmul.mubr.bf16.gmra.mrb[0].mxu0 %v1601
    %v2408 = vpop.f32.mrb[0].mxu0
    %v2409 = vadd.f32 %v2312, %v2408
    %v2410 = vpop.f32.mrb[0].mxu0
    %v2411 = vpop.f32.mrb[0].mxu0
    %v2412 = vadd.f32 %v2315, %v2411
    %v2413 = vpop.f32.mrb[0].mxu0
    %2414 = vmatprep.mubr.bf16.mxu0 %v1610
    %2415 = vmatmul.mubr.bf16.gmra.mrb[0].mxu0 %v1609
    %v2416 = vpop.f32.mrb[0].mxu0
    %v2417 = vadd.f32 %v2320, %v2416
    %v2418 = vpop.f32.mrb[0].mxu0
    %v2419 = vpop.f32.mrb[0].mxu0
    %v2420 = vadd.f32 %v2323, %v2419
    %v2421 = vpop.f32.mrb[0].mxu0
    %2422 = vmatprep.mubr.bf16.mxu0 %v1618
    %2423 = vmatmul.mubr.bf16.gmra.mrb[0].mxu0 %v1617
    %v2424 = vpop.f32.mrb[0].mxu0
    %v2425 = vadd.f32 %v2328, %v2424
    %v2426 = vpop.f32.mrb[0].mxu0
    %v2427 = vpop.f32.mrb[0].mxu0
    %v2428 = vadd.f32 %v2331, %v2427
    %v2429 = vpop.f32.mrb[0].mxu0
    %2430 = vdwg.mxu0
    %2431 = vmatprep.subr.bf16.mxu0 0
    %2432 = vmatpush1.bf16.msra.mxu0 %v2060
    %2433 = vmatprep.subr.bf16.mxu0 0
    %2434 = vmatpush1.bf16.msra.mxu0 %v2061
    %2435 = vmatprep.subr.bf16.mxu0 0
    %2436 = vmatpush1.bf16.msra.mxu0 %v2062
    %2437 = vmatprep.subr.bf16.mxu0 0
    %2438 = vmatpush1.bf16.msra.mxu0 %v2063
    %2439 = vmatprep.subr.bf16.mxu0 0
    %2440 = vmatpush1.bf16.msra.mxu0 %v2064
    %2441 = vmatprep.subr.bf16.mxu0 0
    %2442 = vmatpush1.bf16.msra.mxu0 %v2065
    %2443 = vmatprep.subr.bf16.mxu0 0
    %2444 = vmatpush1.bf16.msra.mxu0 %v2066
    %2445 = vmatprep.subr.bf16.mxu0 0
    %2446 = vmatpush1.bf16.msra.mxu0 %v2067
    %2447 = vmatprep.subr.bf16.mxu0 0
    %2448 = vmatpush1.bf16.msra.mxu0 %v2068
    %2449 = vmatprep.subr.bf16.mxu0 0
    %2450 = vmatpush1.bf16.msra.mxu0 %v2069
    %2451 = vmatprep.subr.bf16.mxu0 0
    %2452 = vmatpush1.bf16.msra.mxu0 %v2070
    %2453 = vmatprep.subr.bf16.mxu0 0
    %2454 = vmatpush1.bf16.msra.mxu0 %v2071
    %2455 = vmatprep.subr.bf16.mxu0 0
    %2456 = vmatpush1.bf16.msra.mxu0 %v2072
    %2457 = vmatprep.subr.bf16.mxu0 0
    %2458 = vmatpush1.bf16.msra.mxu0 %v2073
    %2459 = vmatprep.subr.bf16.mxu0 0
    %2460 = vmatpush1.bf16.msra.mxu0 %v2074
    %2461 = vmatprep.subr.bf16.mxu0 0
    %2462 = vmatpush1.bf16.msra.mxu0 %v2075
    %2463 = vmatprep.mubr.bf16.mxu0 %v1564
    %2464 = vmatmul.mubr.bf16.gmra.mrb[0].mxu0 %v1563
    %v2465 = vpop.f32.mrb[0].mxu0
    %v2466 = vadd.f32 %v2369, %v2465
    %v2467 = vpop.f32.mrb[0].mxu0
    %v2468 = vpop.f32.mrb[0].mxu0
    %v2469 = vadd.f32 %v2372, %v2468
    %v2470 = vpop.f32.mrb[0].mxu0
    %2471 = vmatprep.mubr.bf16.mxu0 %v1572
    %2472 = vmatmul.mubr.bf16.gmra.mrb[0].mxu0 %v1571
    %v2473 = vpop.f32.mrb[0].mxu0
    %v2474 = vadd.f32 %v2377, %v2473
    %v2475 = vpop.f32.mrb[0].mxu0
    %v2476 = vpop.f32.mrb[0].mxu0
    %v2477 = vadd.f32 %v2380, %v2476
    %v2478 = vpop.f32.mrb[0].mxu0
    %2479 = vmatprep.mubr.bf16.mxu0 %v1580
    %2480 = vmatmul.mubr.bf16.gmra.mrb[0].mxu0 %v1579
    %v2481 = vpop.f32.mrb[0].mxu0
    %v2482 = vadd.f32 %v2385, %v2481
    %v2483 = vpop.f32.mrb[0].mxu0
    %v2484 = vpop.f32.mrb[0].mxu0
    %v2485 = vadd.f32 %v2388, %v2484
    %v2486 = vpop.f32.mrb[0].mxu0
    %2487 = vmatprep.mubr.bf16.mxu0 %v1588
    %2488 = vmatmul.mubr.bf16.gmra.mrb[0].mxu0 %v1587
    %v2489 = vpop.f32.mrb[0].mxu0
    %v2490 = vadd.f32 %v2393, %v2489
    %v2491 = vpop.f32.mrb[0].mxu0
    %v2492 = vpop.f32.mrb[0].mxu0
    %v2493 = vadd.f32 %v2396, %v2492
    %v2494 = vpop.f32.mrb[0].mxu0
    %2495 = vmatprep.mubr.bf16.mxu0 %v1596
    %2496 = vmatmul.mubr.bf16.gmra.mrb[0].mxu0 %v1595
    %v2497 = vpop.f32.mrb[0].mxu0
    %v2498 = vadd.f32 %v2401, %v2497
    %v2499 = vpop.f32.mrb[0].mxu0
    %v2500 = vpop.f32.mrb[0].mxu0
    %v2501 = vadd.f32 %v2404, %v2500
    %v2502 = vpop.f32.mrb[0].mxu0
    %2503 = vmatprep.mubr.bf16.mxu0 %v1604
    %2504 = vmatmul.mubr.bf16.gmra.mrb[0].mxu0 %v1603
    %v2505 = vpop.f32.mrb[0].mxu0
    %v2506 = vadd.f32 %v2409, %v2505
    %v2507 = vpop.f32.mrb[0].mxu0
    %v2508 = vpop.f32.mrb[0].mxu0
    %v2509 = vadd.f32 %v2412, %v2508
    %v2510 = vpop.f32.mrb[0].mxu0
    %2511 = vmatprep.mubr.bf16.mxu0 %v1612
    %2512 = vmatmul.mubr.bf16.gmra.mrb[0].mxu0 %v1611
    %v2513 = vpop.f32.mrb[0].mxu0
    %v2514 = vadd.f32 %v2417, %v2513
    %v2515 = vpop.f32.mrb[0].mxu0
    %v2516 = vpop.f32.mrb[0].mxu0
    %v2517 = vadd.f32 %v2420, %v2516
    %v2518 = vpop.f32.mrb[0].mxu0
    %2519 = vmatprep.mubr.bf16.mxu0 %v1620
    %2520 = vmatmul.mubr.bf16.gmra.mrb[0].mxu0 %v1619
    %v2521 = vpop.f32.mrb[0].mxu0
    %v2522 = vadd.f32 %v2425, %v2521
    %v2523 = vpop.f32.mrb[0].mxu0
    %v2524 = vpop.f32.mrb[0].mxu0
    %v2525 = vadd.f32 %v2428, %v2524
    %v2526 = vpop.f32.mrb[0].mxu0
    %2527 = vdwg.mxu0
    %v2528 = vmax.f32 %v2466, 0.0
    %v2529 = vmax.f32 %v2469, 0.0
    %v2530 = vmax.f32 %v2474, 0.0
    %v2531 = vmax.f32 %v2477, 0.0
    %v2532 = vmax.f32 %v2482, 0.0
    %v2533 = vmax.f32 %v2485, 0.0
    %v2534 = vmax.f32 %v2490, 0.0
    %v2535 = vmax.f32 %v2493, 0.0
    %v2536 = vmax.f32 %v2498, 0.0
    %v2537 = vmax.f32 %v2501, 0.0
    %v2538 = vmax.f32 %v2506, 0.0
    %v2539 = vmax.f32 %v2509, 0.0
    %v2540 = vmax.f32 %v2514, 0.0
    %v2541 = vmax.f32 %v2517, 0.0
    %v2542 = vmax.f32 %v2522, 0.0
    %v2543 = vmax.f32 %v2525, 0.0
    %v2544 = vpack.c.bf16 %v2529, %v2528
    %v2545 = vpack.c.bf16 %v2531, %v2530
    %v2546 = vpack.c.bf16 %v2533, %v2532
    %v2547 = vpack.c.bf16 %v2535, %v2534
    %v2548 = vpack.c.bf16 %v2537, %v2536
    %v2549 = vpack.c.bf16 %v2539, %v2538
    %v2550 = vpack.c.bf16 %v2541, %v2540
    %v2551 = vpack.c.bf16 %v2543, %v2542
    %v2552 = vld [vmem:[%s3] sm:$0xf]
    %v2553 = vld [vmem:[%s3 + $0x4] sm:$0xf]
    %v2554 = vld [vmem:[%s3 + $0x8] sm:$0xf]
    %v2555 = vld [vmem:[%s3 + $0xc] sm:$0xf]
    %v2556 = vld [vmem:[%s3 + $0x10] sm:$0xf]
    %v2557 = vld [vmem:[%s3 + $0x14] sm:$0xf]
    %v2558 = vld [vmem:[%s3 + $0x18] sm:$0xf]
    %v2559 = vld [vmem:[%s3 + $0x1c] sm:$0xf]
    %v2560 = vld [vmem:[%s3 + $0x20] sm:$0xf]
    %v2561 = vld [vmem:[%s3 + $0x24] sm:$0xf]
    %v2562 = vld [vmem:[%s3 + $0x28] sm:$0xf]
    %v2563 = vld [vmem:[%s3 + $0x2c] sm:$0xf]
    %v2564 = vld [vmem:[%s3 + $0x30] sm:$0xf]
    %v2565 = vld [vmem:[%s3 + $0x34] sm:$0xf]
    %v2566 = vld [vmem:[%s3 + $0x38] sm:$0xf]
    %v2567 = vld [vmem:[%s3 + $0x3c] sm:$0xf]
    %v2568 = vld [vmem:[%s4] sm:$0x1]
    %v2570 = vlaneseq
    %v2571 = vshrl.u32 %v2570, 7
    %v2572 = vsub.s32 0, %v2571
    %v2573 = vrot.slane %v2568, %v2572
    %v2591 = vunpack.c.l.b16 %v2552
    %v2592 = vunpack.c.l.b16 %v2553
    %v2593 = vunpack.c.l.b16 %v2554
    %v2594 = vunpack.c.l.b16 %v2555
    %v2595 = vunpack.c.l.b16 %v2556
    %v2596 = vunpack.c.l.b16 %v2557
    %v2597 = vunpack.c.l.b16 %v2558
    %v2598 = vunpack.c.l.b16 %v2559
    %v2599 = vunpack.c.l.b16 %v2560
    %v2600 = vunpack.c.l.b16 %v2561
    %v2601 = vunpack.c.l.b16 %v2562
    %v2602 = vunpack.c.l.b16 %v2563
    %v2603 = vunpack.c.l.b16 %v2564
    %v2604 = vunpack.c.l.b16 %v2565
    %v2605 = vunpack.c.l.b16 %v2566
    %v2606 = vunpack.c.l.b16 %v2567
    %v2607 = vpack.c.b16 %v2592, %v2591
    %v2608 = vpack.c.b16 %v2594, %v2593
    %v2609 = vpack.c.b16 %v2596, %v2595
    %v2610 = vpack.c.b16 %v2598, %v2597
    %v2611 = vpack.c.b16 %v2600, %v2599
    %v2612 = vpack.c.b16 %v2602, %v2601
    %v2613 = vpack.c.b16 %v2604, %v2603
    %v2614 = vpack.c.b16 %v2606, %v2605
    %2623 = vmatprep.subr.bf16.mxu0 0
    %2624 = vmatpush1.bf16.msra.mxu0 %v2607
    %2625 = vmatprep.subr.bf16.mxu0 0
    %2626 = vmatpush1.bf16.msra.mxu0 %v2608
    %2627 = vmatprep.subr.bf16.mxu0 0
    %2628 = vmatpush1.bf16.msra.mxu0 %v2609
    %2629 = vmatprep.subr.bf16.mxu0 0
    %2630 = vmatpush1.bf16.msra.mxu0 %v2610
    %2631 = vmatprep.subr.bf16.mxu0 0
    %2632 = vmatpush1.bf16.msra.mxu0 %v2611
    %2633 = vmatprep.subr.bf16.mxu0 0
    %2634 = vmatpush1.bf16.msra.mxu0 %v2612
    %2635 = vmatprep.subr.bf16.mxu0 0
    %2636 = vmatpush1.bf16.msra.mxu0 %v2613
    %2637 = vmatprep.subr.bf16.mxu0 0
    %2638 = vmatpush1.bf16.msra.mxu0 %v2614
    %2639 = vmatprep.subr.bf16.mxu0 0
    %2640 = vmatpush1.bf16.msra.mxu0 0
    %2641 = vmatprep.subr.bf16.mxu0 0
    %2642 = vmatpush1.bf16.msra.mxu0 0
    %2643 = vmatprep.subr.bf16.mxu0 0
    %2644 = vmatpush1.bf16.msra.mxu0 0
    %2645 = vmatprep.subr.bf16.mxu0 0
    %2646 = vmatpush1.bf16.msra.mxu0 0
    %2647 = vmatprep.subr.bf16.mxu0 0
    %2648 = vmatpush1.bf16.msra.mxu0 0
    %2649 = vmatprep.subr.bf16.mxu0 0
    %2650 = vmatpush1.bf16.msra.mxu0 0
    %2651 = vmatprep.subr.bf16.mxu0 0
    %2652 = vmatpush1.bf16.msra.mxu0 0
    %2653 = vmatprep.subr.bf16.mxu0 0
    %2654 = vmatpush1.bf16.msra.mxu0 0
    %2655 = vmatprep.mubr.bf16.mxu0 0
    %2656 = vmatmul.mubr.bf16.gmra.mrb[0].mxu0 %v2544
    %v2657 = vpop.f32.mrb[0].mxu0
    %v2658 = vadd.f32 %v2573, %v2657
    %v2659 = vpop.f32.mrb[0].mxu0
    %v2660 = vpop.f32.mrb[0].mxu0
    %v2661 = vadd.f32 %v2573, %v2660
    %v2662 = vpop.f32.mrb[0].mxu0
    %2663 = vmatprep.mubr.bf16.mxu0 0
    %2664 = vmatmul.mubr.bf16.gmra.mrb[0].mxu0 %v2545
    %v2665 = vpop.f32.mrb[0].mxu0
    %v2666 = vadd.f32 %v2573, %v2665
    %v2667 = vpop.f32.mrb[0].mxu0
    %v2668 = vpop.f32.mrb[0].mxu0
    %v2669 = vadd.f32 %v2573, %v2668
    %v2670 = vpop.f32.mrb[0].mxu0
    %2671 = vmatprep.mubr.bf16.mxu0 0
    %2672 = vmatmul.mubr.bf16.gmra.mrb[0].mxu0 %v2546
    %v2673 = vpop.f32.mrb[0].mxu0
    %v2674 = vadd.f32 %v2573, %v2673
    %v2675 = vpop.f32.mrb[0].mxu0
    %v2676 = vpop.f32.mrb[0].mxu0
    %v2677 = vadd.f32 %v2573, %v2676
    %v2678 = vpop.f32.mrb[0].mxu0
    %2679 = vmatprep.mubr.bf16.mxu0 0
    %2680 = vmatmul.mubr.bf16.gmra.mrb[0].mxu0 %v2547
    %v2681 = vpop.f32.mrb[0].mxu0
    %v2682 = vadd.f32 %v2573, %v2681
    %v2683 = vpop.f32.mrb[0].mxu0
    %v2684 = vpop.f32.mrb[0].mxu0
    %v2685 = vadd.f32 %v2573, %v2684
    %v2686 = vpop.f32.mrb[0].mxu0
    %2687 = vmatprep.mubr.bf16.mxu0 0
    %2688 = vmatmul.mubr.bf16.gmra.mrb[0].mxu0 %v2548
    %v2689 = vpop.f32.mrb[0].mxu0
    %v2690 = vadd.f32 %v2573, %v2689
    %v2691 = vpop.f32.mrb[0].mxu0
    %v2692 = vpop.f32.mrb[0].mxu0
    %v2693 = vadd.f32 %v2573, %v2692
    %v2694 = vpop.f32.mrb[0].mxu0
    %2695 = vmatprep.mubr.bf16.mxu0 0
    %2696 = vmatmul.mubr.bf16.gmra.mrb[0].mxu0 %v2549
    %v2697 = vpop.f32.mrb[0].mxu0
    %v2698 = vadd.f32 %v2573, %v2697
    %v2699 = vpop.f32.mrb[0].mxu0
    %v2700 = vpop.f32.mrb[0].mxu0
    %v2701 = vadd.f32 %v2573, %v2700
    %v2702 = vpop.f32.mrb[0].mxu0
    %2703 = vmatprep.mubr.bf16.mxu0 0
    %2704 = vmatmul.mubr.bf16.gmra.mrb[0].mxu0 %v2550
    %v2705 = vpop.f32.mrb[0].mxu0
    %v2706 = vadd.f32 %v2573, %v2705
    %v2707 = vpop.f32.mrb[0].mxu0
    %v2708 = vpop.f32.mrb[0].mxu0
    %v2709 = vadd.f32 %v2573, %v2708
    %v2710 = vpop.f32.mrb[0].mxu0
    %2711 = vmatprep.mubr.bf16.mxu0 0
    %2712 = vmatmul.mubr.bf16.gmra.mrb[0].mxu0 %v2551
    %v2713 = vpop.f32.mrb[0].mxu0
    %v2714 = vadd.f32 %v2573, %v2713
    %v2715 = vpop.f32.mrb[0].mxu0
    %v2716 = vpop.f32.mrb[0].mxu0
    %v2717 = vadd.f32 %v2573, %v2716
    %v2718 = vpop.f32.mrb[0].mxu0
    %2719 = vdwg.mxu0
    %v2720 = vpack.c.bf16 %v2661, %v2658
    %v2721 = vpack.c.bf16 %v2669, %v2666
    %v2722 = vpack.c.bf16 %v2677, %v2674
    %v2723 = vpack.c.bf16 %v2685, %v2682
    %v2724 = vpack.c.bf16 %v2693, %v2690
    %v2725 = vpack.c.bf16 %v2701, %v2698
    %v2726 = vpack.c.bf16 %v2709, %v2706
    %v2727 = vpack.c.bf16 %v2717, %v2714
    %v2736 = vcombine.high %v2720, %v2720
    %v2738 = vunpack.c.l.s4 1966171168
    %v2739 = vunpack.c.0.s8 %v2738
    %v2740 = vlaneseq
    %v2741 = vshrl.u32 %v2740, 7
    %v2742 = vsub.s32 %v2739, %v2741
    %v2743 = vrot.slane %v2720, %v2742
    %v2745 = vunpack.c.l.s4 1966171168
    %v2746 = vunpack.c.0.s8 %v2745
    %v2747 = vlaneseq
    %v2748 = vshrl.u32 %v2747, 7
    %v2749 = vsub.s32 %v2746, %v2748
    %v2750 = vrot.slane %v2736, %v2749
    %v2751 = vcombine.high %v2743, %v2743
    %v2752 = vcombine.high %v2750, %v2750
    %v2754 = vunpack.c.l.s4 1966171168
    %v2755 = vunpack.c.0.s8 %v2754
    %v2756 = vlaneseq
    %v2757 = vshrl.u32 %v2756, 7
    %v2758 = vsub.s32 %v2755, %v2757
    %v2759 = vrot.slane %v2743, %v2758
    %v2761 = vunpack.c.l.s4 1966171168
    %v2762 = vunpack.c.0.s8 %v2761
    %v2763 = vlaneseq
    %v2764 = vshrl.u32 %v2763, 7
    %v2765 = vsub.s32 %v2762, %v2764
    %v2766 = vrot.slane %v2750, %v2765
    %v2768 = vunpack.c.l.s4 1966171168
    %v2769 = vunpack.c.0.s8 %v2768
    %v2770 = vlaneseq
    %v2771 = vshrl.u32 %v2770, 7
    %v2772 = vsub.s32 %v2769, %v2771
    %v2773 = vrot.slane %v2751, %v2772
    %v2775 = vunpack.c.l.s4 1966171168
    %v2776 = vunpack.c.0.s8 %v2775
    %v2777 = vlaneseq
    %v2778 = vshrl.u32 %v2777, 7
    %v2779 = vsub.s32 %v2776, %v2778
    %v2780 = vrot.slane %v2752, %v2779
    %v2781 = vcombine.high %v2759, %v2759
    %v2782 = vcombine.high %v2766, %v2766
    %v2783 = vcombine.high %v2773, %v2773
    %v2784 = vcombine.high %v2780, %v2780
    %v2785 = vcombine.high %v2721, %v2721
    %v2787 = vunpack.c.l.s4 1966171168
    %v2788 = vunpack.c.0.s8 %v2787
    %v2789 = vlaneseq
    %v2790 = vshrl.u32 %v2789, 7
    %v2791 = vsub.s32 %v2788, %v2790
    %v2792 = vrot.slane %v2721, %v2791
    %v2794 = vunpack.c.l.s4 1966171168
    %v2795 = vunpack.c.0.s8 %v2794
    %v2796 = vlaneseq
    %v2797 = vshrl.u32 %v2796, 7
    %v2798 = vsub.s32 %v2795, %v2797
    %v2799 = vrot.slane %v2785, %v2798
    %v2800 = vcombine.high %v2792, %v2792
    %v2801 = vcombine.high %v2799, %v2799
    %v2803 = vunpack.c.l.s4 1966171168
    %v2804 = vunpack.c.0.s8 %v2803
    %v2805 = vlaneseq
    %v2806 = vshrl.u32 %v2805, 7
    %v2807 = vsub.s32 %v2804, %v2806
    %v2808 = vrot.slane %v2792, %v2807
    %v2810 = vunpack.c.l.s4 1966171168
    %v2811 = vunpack.c.0.s8 %v2810
    %v2812 = vlaneseq
    %v2813 = vshrl.u32 %v2812, 7
    %v2814 = vsub.s32 %v2811, %v2813
    %v2815 = vrot.slane %v2799, %v2814
    %v2817 = vunpack.c.l.s4 1966171168
    %v2818 = vunpack.c.0.s8 %v2817
    %v2819 = vlaneseq
    %v2820 = vshrl.u32 %v2819, 7
    %v2821 = vsub.s32 %v2818, %v2820
    %v2822 = vrot.slane %v2800, %v2821
    %v2824 = vunpack.c.l.s4 1966171168
    %v2825 = vunpack.c.0.s8 %v2824
    %v2826 = vlaneseq
    %v2827 = vshrl.u32 %v2826, 7
    %v2828 = vsub.s32 %v2825, %v2827
    %v2829 = vrot.slane %v2801, %v2828
    %v2830 = vcombine.high %v2808, %v2808
    %v2831 = vcombine.high %v2815, %v2815
    %v2832 = vcombine.high %v2822, %v2822
    %v2833 = vcombine.high %v2829, %v2829
    %v2834 = vcombine.high %v2722, %v2722
    %v2836 = vunpack.c.l.s4 1966171168
    %v2837 = vunpack.c.0.s8 %v2836
    %v2838 = vlaneseq
    %v2839 = vshrl.u32 %v2838, 7
    %v2840 = vsub.s32 %v2837, %v2839
    %v2841 = vrot.slane %v2722, %v2840
    %v2843 = vunpack.c.l.s4 1966171168
    %v2844 = vunpack.c.0.s8 %v2843
    %v2845 = vlaneseq
    %v2846 = vshrl.u32 %v2845, 7
    %v2847 = vsub.s32 %v2844, %v2846
    %v2848 = vrot.slane %v2834, %v2847
    %v2849 = vcombine.high %v2841, %v2841
    %v2850 = vcombine.high %v2848, %v2848
    %v2852 = vunpack.c.l.s4 1966171168
    %v2853 = vunpack.c.0.s8 %v2852
    %v2854 = vlaneseq
    %v2855 = vshrl.u32 %v2854, 7
    %v2856 = vsub.s32 %v2853, %v2855
    %v2857 = vrot.slane %v2841, %v2856
    %v2859 = vunpack.c.l.s4 1966171168
    %v2860 = vunpack.c.0.s8 %v2859
    %v2861 = vlaneseq
    %v2862 = vshrl.u32 %v2861, 7
    %v2863 = vsub.s32 %v2860, %v2862
    %v2864 = vrot.slane %v2848, %v2863
    %v2866 = vunpack.c.l.s4 1966171168
    %v2867 = vunpack.c.0.s8 %v2866
    %v2868 = vlaneseq
    %v2869 = vshrl.u32 %v2868, 7
    %v2870 = vsub.s32 %v2867, %v2869
    %v2871 = vrot.slane %v2849, %v2870
    %v2873 = vunpack.c.l.s4 1966171168
    %v2874 = vunpack.c.0.s8 %v2873
    %v2875 = vlaneseq
    %v2876 = vshrl.u32 %v2875, 7
    %v2877 = vsub.s32 %v2874, %v2876
    %v2878 = vrot.slane %v2850, %v2877
    %v2879 = vcombine.high %v2857, %v2857
    %v2880 = vcombine.high %v2864, %v2864
    %v2881 = vcombine.high %v2871, %v2871
    %v2882 = vcombine.high %v2878, %v2878
    %v2883 = vcombine.high %v2723, %v2723
    %v2885 = vunpack.c.l.s4 1966171168
    %v2886 = vunpack.c.0.s8 %v2885
    %v2887 = vlaneseq
    %v2888 = vshrl.u32 %v2887, 7
    %v2889 = vsub.s32 %v2886, %v2888
    %v2890 = vrot.slane %v2723, %v2889
    %v2892 = vunpack.c.l.s4 1966171168
    %v2893 = vunpack.c.0.s8 %v2892
    %v2894 = vlaneseq
    %v2895 = vshrl.u32 %v2894, 7
    %v2896 = vsub.s32 %v2893, %v2895
    %v2897 = vrot.slane %v2883, %v2896
    %v2898 = vcombine.high %v2890, %v2890
    %v2899 = vcombine.high %v2897, %v2897
    %v2901 = vunpack.c.l.s4 1966171168
    %v2902 = vunpack.c.0.s8 %v2901
    %v2903 = vlaneseq
    %v2904 = vshrl.u32 %v2903, 7
    %v2905 = vsub.s32 %v2902, %v2904
    %v2906 = vrot.slane %v2890, %v2905
    %v2908 = vunpack.c.l.s4 1966171168
    %v2909 = vunpack.c.0.s8 %v2908
    %v2910 = vlaneseq
    %v2911 = vshrl.u32 %v2910, 7
    %v2912 = vsub.s32 %v2909, %v2911
    %v2913 = vrot.slane %v2897, %v2912
    %v2915 = vunpack.c.l.s4 1966171168
    %v2916 = vunpack.c.0.s8 %v2915
    %v2917 = vlaneseq
    %v2918 = vshrl.u32 %v2917, 7
    %v2919 = vsub.s32 %v2916, %v2918
    %v2920 = vrot.slane %v2898, %v2919
    %v2922 = vunpack.c.l.s4 1966171168
    %v2923 = vunpack.c.0.s8 %v2922
    %v2924 = vlaneseq
    %v2925 = vshrl.u32 %v2924, 7
    %v2926 = vsub.s32 %v2923, %v2925
    %v2927 = vrot.slane %v2899, %v2926
    %v2928 = vcombine.high %v2906, %v2906
    %v2929 = vcombine.high %v2913, %v2913
    %v2930 = vcombine.high %v2920, %v2920
    %v2931 = vcombine.high %v2927, %v2927
    %v2932 = vcombine.high %v2724, %v2724
    %v2934 = vunpack.c.l.s4 1966171168
    %v2935 = vunpack.c.0.s8 %v2934
    %v2936 = vlaneseq
    %v2937 = vshrl.u32 %v2936, 7
    %v2938 = vsub.s32 %v2935, %v2937
    %v2939 = vrot.slane %v2724, %v2938
    %v2941 = vunpack.c.l.s4 1966171168
    %v2942 = vunpack.c.0.s8 %v2941
    %v2943 = vlaneseq
    %v2944 = vshrl.u32 %v2943, 7
    %v2945 = vsub.s32 %v2942, %v2944
    %v2946 = vrot.slane %v2932, %v2945
    %v2947 = vcombine.high %v2939, %v2939
    %v2948 = vcombine.high %v2946, %v2946
    %v2950 = vunpack.c.l.s4 1966171168
    %v2951 = vunpack.c.0.s8 %v2950
    %v2952 = vlaneseq
    %v2953 = vshrl.u32 %v2952, 7
    %v2954 = vsub.s32 %v2951, %v2953
    %v2955 = vrot.slane %v2939, %v2954
    %v2957 = vunpack.c.l.s4 1966171168
    %v2958 = vunpack.c.0.s8 %v2957
    %v2959 = vlaneseq
    %v2960 = vshrl.u32 %v2959, 7
    %v2961 = vsub.s32 %v2958, %v2960
    %v2962 = vrot.slane %v2946, %v2961
    %v2964 = vunpack.c.l.s4 1966171168
    %v2965 = vunpack.c.0.s8 %v2964
    %v2966 = vlaneseq
    %v2967 = vshrl.u32 %v2966, 7
    %v2968 = vsub.s32 %v2965, %v2967
    %v2969 = vrot.slane %v2947, %v2968
    %v2971 = vunpack.c.l.s4 1966171168
    %v2972 = vunpack.c.0.s8 %v2971
    %v2973 = vlaneseq
    %v2974 = vshrl.u32 %v2973, 7
    %v2975 = vsub.s32 %v2972, %v2974
    %v2976 = vrot.slane %v2948, %v2975
    %v2977 = vcombine.high %v2955, %v2955
    %v2978 = vcombine.high %v2962, %v2962
    %v2979 = vcombine.high %v2969, %v2969
    %v2980 = vcombine.high %v2976, %v2976
    %v2981 = vcombine.high %v2725, %v2725
    %v2983 = vunpack.c.l.s4 1966171168
    %v2984 = vunpack.c.0.s8 %v2983
    %v2985 = vlaneseq
    %v2986 = vshrl.u32 %v2985, 7
    %v2987 = vsub.s32 %v2984, %v2986
    %v2988 = vrot.slane %v2725, %v2987
    %v2990 = vunpack.c.l.s4 1966171168
    %v2991 = vunpack.c.0.s8 %v2990
    %v2992 = vlaneseq
    %v2993 = vshrl.u32 %v2992, 7
    %v2994 = vsub.s32 %v2991, %v2993
    %v2995 = vrot.slane %v2981, %v2994
    %v2996 = vcombine.high %v2988, %v2988
    %v2997 = vcombine.high %v2995, %v2995
    %v2999 = vunpack.c.l.s4 1966171168
    %v3000 = vunpack.c.0.s8 %v2999
    %v3001 = vlaneseq
    %v3002 = vshrl.u32 %v3001, 7
    %v3003 = vsub.s32 %v3000, %v3002
    %v3004 = vrot.slane %v2988, %v3003
    %v3006 = vunpack.c.l.s4 1966171168
    %v3007 = vunpack.c.0.s8 %v3006
    %v3008 = vlaneseq
    %v3009 = vshrl.u32 %v3008, 7
    %v3010 = vsub.s32 %v3007, %v3009
    %v3011 = vrot.slane %v2995, %v3010
    %v3013 = vunpack.c.l.s4 1966171168
    %v3014 = vunpack.c.0.s8 %v3013
    %v3015 = vlaneseq
    %v3016 = vshrl.u32 %v3015, 7
    %v3017 = vsub.s32 %v3014, %v3016
    %v3018 = vrot.slane %v2996, %v3017
    %v3020 = vunpack.c.l.s4 1966171168
    %v3021 = vunpack.c.0.s8 %v3020
    %v3022 = vlaneseq
    %v3023 = vshrl.u32 %v3022, 7
    %v3024 = vsub.s32 %v3021, %v3023
    %v3025 = vrot.slane %v2997, %v3024
    %v3026 = vcombine.high %v3004, %v3004
    %v3027 = vcombine.high %v3011, %v3011
    %v3028 = vcombine.high %v3018, %v3018
    %v3029 = vcombine.high %v3025, %v3025
    %v3030 = vcombine.high %v2726, %v2726
    %v3032 = vunpack.c.l.s4 1966171168
    %v3033 = vunpack.c.0.s8 %v3032
    %v3034 = vlaneseq
    %v3035 = vshrl.u32 %v3034, 7
    %v3036 = vsub.s32 %v3033, %v3035
    %v3037 = vrot.slane %v2726, %v3036
    %v3039 = vunpack.c.l.s4 1966171168
    %v3040 = vunpack.c.0.s8 %v3039
    %v3041 = vlaneseq
    %v3042 = vshrl.u32 %v3041, 7
    %v3043 = vsub.s32 %v3040, %v3042
    %v3044 = vrot.slane %v3030, %v3043
    %v3045 = vcombine.high %v3037, %v3037
    %v3046 = vcombine.high %v3044, %v3044
    %v3048 = vunpack.c.l.s4 1966171168
    %v3049 = vunpack.c.0.s8 %v3048
    %v3050 = vlaneseq
    %v3051 = vshrl.u32 %v3050, 7
    %v3052 = vsub.s32 %v3049, %v3051
    %v3053 = vrot.slane %v3037, %v3052
    %v3055 = vunpack.c.l.s4 1966171168
    %v3056 = vunpack.c.0.s8 %v3055
    %v3057 = vlaneseq
    %v3058 = vshrl.u32 %v3057, 7
    %v3059 = vsub.s32 %v3056, %v3058
    %v3060 = vrot.slane %v3044, %v3059
    %v3062 = vunpack.c.l.s4 1966171168
    %v3063 = vunpack.c.0.s8 %v3062
    %v3064 = vlaneseq
    %v3065 = vshrl.u32 %v3064, 7
    %v3066 = vsub.s32 %v3063, %v3065
    %v3067 = vrot.slane %v3045, %v3066
    %v3069 = vunpack.c.l.s4 1966171168
    %v3070 = vunpack.c.0.s8 %v3069
    %v3071 = vlaneseq
    %v3072 = vshrl.u32 %v3071, 7
    %v3073 = vsub.s32 %v3070, %v3072
    %v3074 = vrot.slane %v3046, %v3073
    %v3075 = vcombine.high %v3053, %v3053
    %v3076 = vcombine.high %v3060, %v3060
    %v3077 = vcombine.high %v3067, %v3067
    %v3078 = vcombine.high %v3074, %v3074
    %v3079 = vcombine.high %v2727, %v2727
    %v3081 = vunpack.c.l.s4 1966171168
    %v3082 = vunpack.c.0.s8 %v3081
    %v3083 = vlaneseq
    %v3084 = vshrl.u32 %v3083, 7
    %v3085 = vsub.s32 %v3082, %v3084
    %v3086 = vrot.slane %v2727, %v3085
    %v3088 = vunpack.c.l.s4 1966171168
    %v3089 = vunpack.c.0.s8 %v3088
    %v3090 = vlaneseq
    %v3091 = vshrl.u32 %v3090, 7
    %v3092 = vsub.s32 %v3089, %v3091
    %v3093 = vrot.slane %v3079, %v3092
    %v3094 = vcombine.high %v3086, %v3086
    %v3095 = vcombine.high %v3093, %v3093
    %v3097 = vunpack.c.l.s4 1966171168
    %v3098 = vunpack.c.0.s8 %v3097
    %v3099 = vlaneseq
    %v3100 = vshrl.u32 %v3099, 7
    %v3101 = vsub.s32 %v3098, %v3100
    %v3102 = vrot.slane %v3086, %v3101
    %v3104 = vunpack.c.l.s4 1966171168
    %v3105 = vunpack.c.0.s8 %v3104
    %v3106 = vlaneseq
    %v3107 = vshrl.u32 %v3106, 7
    %v3108 = vsub.s32 %v3105, %v3107
    %v3109 = vrot.slane %v3093, %v3108
    %v3111 = vunpack.c.l.s4 1966171168
    %v3112 = vunpack.c.0.s8 %v3111
    %v3113 = vlaneseq
    %v3114 = vshrl.u32 %v3113, 7
    %v3115 = vsub.s32 %v3112, %v3114
    %v3116 = vrot.slane %v3094, %v3115
    %v3118 = vunpack.c.l.s4 1966171168
    %v3119 = vunpack.c.0.s8 %v3118
    %v3120 = vlaneseq
    %v3121 = vshrl.u32 %v3120, 7
    %v3122 = vsub.s32 %v3119, %v3121
    %v3123 = vrot.slane %v3095, %v3122
    %v3124 = vcombine.high %v3102, %v3102
    %v3125 = vcombine.high %v3109, %v3109
    %v3126 = vcombine.high %v3116, %v3116
    %v3127 = vcombine.high %v3123, %v3123
    %3192 = vst [vmem:[#allocation2] sm:$0x1] %v2759
    %3193 = vst [vmem:[#allocation2 + $0x1] sm:$0x1] %v2773
    %3194 = vst [vmem:[#allocation2 + $0x2] sm:$0x1] %v2781
    %3195 = vst [vmem:[#allocation2 + $0x3] sm:$0x1] %v2783
    %3196 = vst [vmem:[#allocation2 + $0x4] sm:$0x1] %v2766
    %3197 = vst [vmem:[#allocation2 + $0x5] sm:$0x1] %v2780
    %3198 = vst [vmem:[#allocation2 + $0x6] sm:$0x1] %v2782
    %3199 = vst [vmem:[#allocation2 + $0x7] sm:$0x1] %v2784
    %3200 = vst [vmem:[#allocation2 + $0x8] sm:$0x1] %v2808
    %3201 = vst [vmem:[#allocation2 + $0x9] sm:$0x1] %v2822
    %3202 = vst [vmem:[#allocation2 + $0xa] sm:$0x1] %v2830
    %3203 = vst [vmem:[#allocation2 + $0xb] sm:$0x1] %v2832
    %3204 = vst [vmem:[#allocation2 + $0xc] sm:$0x1] %v2815
    %3205 = vst [vmem:[#allocation2 + $0xd] sm:$0x1] %v2829
    %3206 = vst [vmem:[#allocation2 + $0xe] sm:$0x1] %v2831
    %3207 = vst [vmem:[#allocation2 + $0xf] sm:$0x1] %v2833
    %3208 = vst [vmem:[#allocation2 + $0x10] sm:$0x1] %v2857
    %3209 = vst [vmem:[#allocation2 + $0x11] sm:$0x1] %v2871
    %3210 = vst [vmem:[#allocation2 + $0x12] sm:$0x1] %v2879
    %3211 = vst [vmem:[#allocation2 + $0x13] sm:$0x1] %v2881
    %3212 = vst [vmem:[#allocation2 + $0x14] sm:$0x1] %v2864
    %3213 = vst [vmem:[#allocation2 + $0x15] sm:$0x1] %v2878
    %3214 = vst [vmem:[#allocation2 + $0x16] sm:$0x1] %v2880
    %3215 = vst [vmem:[#allocation2 + $0x17] sm:$0x1] %v2882
    %3216 = vst [vmem:[#allocation2 + $0x18] sm:$0x1] %v2906
    %3217 = vst [vmem:[#allocation2 + $0x19] sm:$0x1] %v2920
    %3218 = vst [vmem:[#allocation2 + $0x1a] sm:$0x1] %v2928
    %3219 = vst [vmem:[#allocation2 + $0x1b] sm:$0x1] %v2930
    %3220 = vst [vmem:[#allocation2 + $0x1c] sm:$0x1] %v2913
    %3221 = vst [vmem:[#allocation2 + $0x1d] sm:$0x1] %v2927
    %3222 = vst [vmem:[#allocation2 + $0x1e] sm:$0x1] %v2929
    %3223 = vst [vmem:[#allocation2 + $0x1f] sm:$0x1] %v2931
    %3224 = vst [vmem:[#allocation2 + $0x20] sm:$0x1] %v2955
    %3225 = vst [vmem:[#allocation2 + $0x21] sm:$0x1] %v2969
    %3226 = vst [vmem:[#allocation2 + $0x22] sm:$0x1] %v2977
    %3227 = vst [vmem:[#allocation2 + $0x23] sm:$0x1] %v2979
    %3228 = vst [vmem:[#allocation2 + $0x24] sm:$0x1] %v2962
    %3229 = vst [vmem:[#allocation2 + $0x25] sm:$0x1] %v2976
    %3230 = vst [vmem:[#allocation2 + $0x26] sm:$0x1] %v2978
    %3231 = vst [vmem:[#allocation2 + $0x27] sm:$0x1] %v2980
    %3232 = vst [vmem:[#allocation2 + $0x28] sm:$0x1] %v3004
    %3233 = vst [vmem:[#allocation2 + $0x29] sm:$0x1] %v3018
    %3234 = vst [vmem:[#allocation2 + $0x2a] sm:$0x1] %v3026
    %3235 = vst [vmem:[#allocation2 + $0x2b] sm:$0x1] %v3028
    %3236 = vst [vmem:[#allocation2 + $0x2c] sm:$0x1] %v3011
    %3237 = vst [vmem:[#allocation2 + $0x2d] sm:$0x1] %v3025
    %3238 = vst [vmem:[#allocation2 + $0x2e] sm:$0x1] %v3027
    %3239 = vst [vmem:[#allocation2 + $0x2f] sm:$0x1] %v3029
    %3240 = vst [vmem:[#allocation2 + $0x30] sm:$0x1] %v3053
    %3241 = vst [vmem:[#allocation2 + $0x31] sm:$0x1] %v3067
    %3242 = vst [vmem:[#allocation2 + $0x32] sm:$0x1] %v3075
    %3243 = vst [vmem:[#allocation2 + $0x33] sm:$0x1] %v3077
    %3244 = vst [vmem:[#allocation2 + $0x34] sm:$0x1] %v3060
    %3245 = vst [vmem:[#allocation2 + $0x35] sm:$0x1] %v3074
    %3246 = vst [vmem:[#allocation2 + $0x36] sm:$0x1] %v3076
    %3247 = vst [vmem:[#allocation2 + $0x37] sm:$0x1] %v3078
    %3248 = vst [vmem:[#allocation2 + $0x38] sm:$0x1] %v3102
    %3249 = vst [vmem:[#allocation2 + $0x39] sm:$0x1] %v3116
    %3250 = vst [vmem:[#allocation2 + $0x3a] sm:$0x1] %v3124
    %3251 = vst [vmem:[#allocation2 + $0x3b] sm:$0x1] %v3126
    %3252 = vst [vmem:[#allocation2 + $0x3c] sm:$0x1] %v3109
    %3253 = vst [vmem:[#allocation2 + $0x3d] sm:$0x1] %v3123
    %3254 = vst [vmem:[#allocation2 + $0x3e] sm:$0x1] %v3125
    %3255 = vst [vmem:[#allocation2 + $0x3f] sm:$0x1] %v3127
    // Predicated region
    $region22: #{my_ann_forward.1} parent=1 // pred_check
      _
    $region23: #{my_ann_forward.1} parent=1 // pred_check_branch
      %3257 = sbr.rel (0) target = $region25
    $region24: #{my_ann_forward.1} parent=1 // pred_region
      // Predicated region
      $region26: #{my_ann_forward.1} parent=24 // pred_check
        _
      $region27: #{my_ann_forward.1} parent=24 // pred_check_branch
        %3259 = sbr.rel (0) target = $region29
      $region28: #{my_ann_forward.1} parent=24 // pred_region
        // Predicated region
        $region30: #{my_ann_forward.1} parent=28 // pred_check
          _
        $region31: #{my_ann_forward.1} parent=28 // pred_check_branch
          %3261 = sbr.rel target = $region33
        $region32: #{my_ann_forward.1} parent=28 // pred_region
          // Predicated region
          $region45: #{my_ann_forward.1} parent=32 // pred_check
            _
          $region46: #{my_ann_forward.1} parent=32 // pred_check_branch
            %3276 = sbr.rel (0) target = $region48
          $region47: #{my_ann_forward.1} parent=32 // pred_region
            loop: start=0, step=1, limit=1
            $region49: #{my_ann_forward.1} parent=47 // loop_pre_header
              _
            $region50: #{my_ann_forward.1} parent=47 // loop_header
              %s3279 = sphi 0, %s3283
              %p3280 = scmp.ge.s32.totalorder %s3279, 1
              %s3284 = sphi [#allocation2], [#allocation2]
              %s3285 = sphi %s5, %s5
            $region51: #{my_ann_forward.1} parent=47 // loop_header_branch
              %3282 = sbr.rel (%p3280) target = $region55
            $region52: #{my_ann_forward.1} parent=47 // loop_body
              %v3286 = vld [vmem:[%s3284] sm:$0x1]
              %3287 = vst [vmem:[%s3285] sm:$0x1] %v3286
            $region53: #{my_ann_forward.1} parent=47 // loop_footer
              %s3283 = sadd.s32 1, %s3279
            $region54: #{my_ann_forward.1} parent=47 // loop_footer_branch
              %3278 = sbr.rel target = $region50
            $region55: #{my_ann_forward.1} parent=47 // loop_exit
              _
          $region48: #{my_ann_forward.1} parent=32 // pred_fallthru
            _
        $region33: #{my_ann_forward.1} parent=28 // pred_fallthru
          _
        // Predicated region
        $region34: #{my_ann_forward.1} parent=28 // pred_check
          _
        $region35: #{my_ann_forward.1} parent=28 // pred_check_branch
          %3263 = sbr.rel (0) target = $region37
        $region36: #{my_ann_forward.1} parent=28 // pred_region
          loop: start=0, step=1, limit=1
          $region38: #{my_ann_forward.1} parent=36 // loop_pre_header
            _
          $region39: #{my_ann_forward.1} parent=36 // loop_header
            %s3266 = sphi 0, %s3270
            %p3267 = scmp.ge.s32.totalorder %s3266, 1
            %s3271 = sphi [#allocation2], [#allocation2]
            %s3272 = sphi %s5, %s5
          $region40: #{my_ann_forward.1} parent=36 // loop_header_branch
            %3269 = sbr.rel (%p3267) target = $region44
          $region41: #{my_ann_forward.1} parent=36 // loop_body
            %v3273 = vld [vmem:[%s3271] sm:$0x1]
            %3274 = vst [vmem:[%s3272] sm:$0x1] %v3273
          $region42: #{my_ann_forward.1} parent=36 // loop_footer
            %s3270 = sadd.s32 1, %s3266
          $region43: #{my_ann_forward.1} parent=36 // loop_footer_branch
            %3265 = sbr.rel target = $region39
          $region44: #{my_ann_forward.1} parent=36 // loop_exit
            _
        $region37: #{my_ann_forward.1} parent=28 // pred_fallthru
          _
      $region29: #{my_ann_forward.1} parent=24 // pred_fallthru
        _
      %3288 = vnop
    $region25: #{my_ann_forward.1} parent=1 // pred_fallthru
      _
    // Predicated region
    $region56: #{my_ann_forward.1} parent=1 // pred_check
      _
    $region57: #{my_ann_forward.1} parent=1 // pred_check_branch
      %3290 = sbr.rel (0) target = $region59
    $region58: #{my_ann_forward.1} parent=1 // pred_region
      _
    $region59: #{my_ann_forward.1} parent=1 // pred_fallthru
      _

</llo_original>
